<compile_context>
chip_gen: v7x
topology: tpu7x:2x2x1
jax: 0.10.0
libtpu: 0.0.40
codegen_flags: <defaults>
</compile_context>

<pallas_src>
import functools
import math

import jax
import jax.numpy as jnp
from jax import lax
from jax.experimental import pallas as pl
from jax.experimental.pallas import tpu as pltpu


def _mcc_kernel(*refs, tq, num_concepts, embed, seq_len, has_bias):
    """One grid step: batch b, query-row tile qi.

    Refs (has_bias=True):  x_ref (1, L, M), w_ref (M, C*M), b_ref (1, C*M) [f32],
                           o_ref (1, tq, C*L)
    """
    if has_bias:
        x_ref, w_ref, b_ref, o_ref = refs
    else:
        x_ref, w_ref, o_ref = refs
        b_ref = None

    x_keys = x_ref[0]                                   # (L, M): "key" rows
    if x_keys.shape[0] == tq:                           # single q tile
        x_q = x_keys
    else:
        q_start = pl.multiple_of(pl.program_id(1) * tq, tq)
        x_q = x_ref[0, pl.ds(q_start, tq), :]           # (tq, M): "query" rows

    # Fused first matmul over all concepts: (tq, M) @ (M, C*M) -> (tq, C*M),
    # f32 accumulation; bias add and tanh stay in f32 (EUP).
    h = jnp.dot(x_q, w_ref[...], preferred_element_type=jnp.float32)
    if has_bias:
        h = h + b_ref[...]
    h = jnp.tanh(h)

    # Single hoisted cast to the MXU input dtype (no-op in the pure-f32 path);
    # the keys operand is already in that dtype (cast once in the wrapper).
    h = h.astype(x_keys.dtype)

    # Second matmul per concept, contracting last dims (no transpose), storing
    # directly into a static lane slice of the output block.  No concat, no
    # full-width f32 temp -> peak VMEM / vreg pressure drops by ~C x.
    for c in range(num_concepts):
        h_c = h[:, c * embed:(c + 1) * embed]           # (tq, M) static lane slice
        out_c = lax.dot_general(
            h_c, x_keys,
            dimension_numbers=(((1,), (1,)), ((), ())),
            preferred_element_type=jnp.float32,
        )                                               # (tq, L) f32
        o_ref[0, :, c * seq_len:(c + 1) * seq_len] = out_c.astype(o_ref.dtype)


def _vmem_capacity_bytes(default=128 * 1024 * 1024):
    """Physical VMEM per TensorCore (128 MiB v5e/v6e, 64 MiB v7x)."""
    try:
        info = pltpu.get_tpu_info()
        cap = getattr(info, "vmem_capacity_bytes", None)
        if cap:
            return int(cap)
    except Exception:
        pass
    return default


def _pick_q_tile(seq_len, num_concepts, embed, mxu_itemsize, out_itemsize,
                 budget_bytes, min_tile, weight_buffers):
    """Largest q tile (divisor of L, >= min_tile) whose full VMEM footprint fits.

    Accounts for: 2x (double-buffered) output block, the f32 h intermediate,
    its MXU-dtype cast copy, the per-concept f32 result temp, the
    double-buffered resident x block and the (single/double-buffered) W/bias.
    """
    cm = num_concepts * embed
    fixed = 2 * seq_len * embed * mxu_itemsize          # resident x (dbl-buffered)
    fixed += weight_buffers * embed * cm * mxu_itemsize  # W_flat
    fixed += weight_buffers * cm * 4                     # bias (f32)

    def tile_bytes(tq):
        b = 2 * tq * num_concepts * seq_len * out_itemsize   # output, dbl-buffered
        b += tq * cm * 4                                     # f32 h
        if mxu_itemsize != 4:
            b += tq * cm * mxu_itemsize                      # cast copy of h
        b += tq * seq_len * 4                                # per-concept f32 temp
        return b

    candidates = [c for c in (1024, 512, 256, 128, 64, 32, 16, 8)
                  if c >= min_tile and seq_len % c == 0]
    for cand in candidates:                               # descending: first fit = largest
        if fixed + tile_bytes(cand) <= budget_bytes:
            return cand
    if candidates:
        return candidates[-1]                             # smallest legal divisor
    return seq_len                                        # irregular L: one full tile


def mcc_layer(x, weight, bias=None, *, q_tile=None, mxu_dtype=None, out_dtype=None):
    """Pallas implementation of MCCLayer.forward.

    x:      (B, L, M)
    weight: (M, C, M)       -- as in the PyTorch module
    bias:   (1, 1, C, M) or None
    mxu_dtype / out_dtype:  optional reduced-precision fast path (e.g. bf16 MXU
                            inputs + bf16 output) -- defaults keep x.dtype.
    returns (B, L, C, L)
    """
    B, L, M = x.shape
    Mw, C, Mn = weight.shape
    assert Mw == M and Mn == M, (x.shape, weight.shape)

    mxu_dtype = jnp.dtype(mxu_dtype) if mxu_dtype is not None else jnp.dtype(x.dtype)
    out_dtype = jnp.dtype(out_dtype) if out_dtype is not None else jnp.dtype(x.dtype)

    # Parameter / input setup (glue, once, outside the hot loop):
    #   W_flat[m, c*M + n] = weight[m, c, n];  bias_flat[0, c*M + n] = bias[..., c, n]
    x_in = x.astype(mxu_dtype)
    w_flat = weight.reshape(M, C * M).astype(mxu_dtype)
    has_bias = bias is not None
    if has_bias:
        b_flat = bias.reshape(1, C * M).astype(jnp.float32)   # bias add stays f32

    # Generation-aware VMEM budget: 48 MiB on 128 MiB parts, 32 MiB on v7x.
    vmem_cap = _vmem_capacity_bytes()
    vmem_limit = int(min(48 * 1024 * 1024, vmem_cap // 2))
    single_buffer_weights = vmem_cap <= 64 * 1024 * 1024       # v7x-class parts
    weight_buffers = 1 if single_buffer_weights else 2
    tile_budget = max(vmem_limit - 4 * 1024 * 1024, 2 * 1024 * 1024)

    narrow = min(mxu_dtype.itemsize, out_dtype.itemsize)
    min_tile = 8 if narrow >= 4 else (16 if narrow >= 2 else 32)

    tq = q_tile if q_tile is not None else _pick_q_tile(
        L, C, M, mxu_dtype.itemsize, out_dtype.itemsize,
        tile_budget, min_tile, weight_buffers)
    assert L % tq == 0, (L, tq)
    nq = L // tq

    kernel = functools.partial(
        _mcc_kernel, tq=tq, num_concepts=C, embed=M, seq_len=L, has_bias=has_bias)

    def _call(use_single_buffer_weights):
        weight_mode = (dict(pipeline_mode=pl.Buffered(1))
                       if use_single_buffer_weights else {})
        in_specs = [
            # Full sequence for this batch; block index constant across qi ->
            # stays VMEM-resident across the q-tile axis.
            pl.BlockSpec((1, L, M), lambda b, qi: (b, 0, 0)),
            # Fused weights: constant block index -> DMA'd once, resident all grid.
            pl.BlockSpec((M, C * M), lambda b, qi: (0, 0), **weight_mode),
        ]
        operands = [x_in, w_flat]
        if has_bias:
            in_specs.append(
                pl.BlockSpec((1, C * M), lambda b, qi: (0, 0), **weight_mode))
            operands.append(b_flat)

        return pl.pallas_call(
            kernel,
            out_shape=jax.ShapeDtypeStruct((B, L, C * L), out_dtype),
            grid_spec=pltpu.PrefetchScalarGridSpec(
                num_scalar_prefetch=0,
                grid=(B, nq),
                in_specs=in_specs,
                # Lane-dense output block: last dim = full C*L extent.
                out_specs=pl.BlockSpec((1, tq, C * L), lambda b, qi: (b, qi, 0)),
            ),
            compiler_params=pltpu.CompilerParams(
                dimension_semantics=("parallel", "parallel"),
                vmem_limit_bytes=vmem_limit,
            ),
        )(*operands)

    if single_buffer_weights:
        try:
            out_flat = _call(True)
        except Exception:
            # Older jax without pipeline_mode / Buffered(1) support: fall back.
            out_flat = _call(False)
    else:
        out_flat = _call(False)

    # Free row-major reshape to the PyTorch output layout (no transpose pass).
    return out_flat.reshape(B, L, C, L)


def mcc_layer_ref(x, weight, bias):
    """Pure-JAX reference matching the PyTorch forward exactly."""
    h = jnp.einsum("blm,mcn->blcn", x, weight)
    if bias is not None:
        h = h + bias
    h = jnp.tanh(h)
    return jnp.einsum("blcn,bjn->blcj", h, x)


if __name__ == "__main__":
    B, L, M, C = 2, 256, 128, 4   # batch, seq, embed, concepts (lane/MXU aligned)

    key = jax.random.PRNGKey(0)
    k_w, k_b, k_x = jax.random.split(key, 3)

    # Deterministic init mirroring reset_parameters():
    # kaiming_uniform_(weight, nonlinearity='tanh'): fan_in = C * M, gain = 5/3.
    fan_in = C * M
    gain = 5.0 / 3.0
    w_bound = gain * math.sqrt(3.0 / fan_in)
    weight = jax.random.uniform(
        k_w, (M, C, M), jnp.float32, minval=-w_bound, maxval=w_bound)
    b_bound = 1.0 / M
    bias = jax.random.uniform(
        k_b, (1, 1, C, M), jnp.float32, minval=-b_bound, maxval=b_bound)
    x = jax.random.normal(k_x, (B, L, M), jnp.float32)

    ref = jax.block_until_ready(mcc_layer_ref(x, weight, bias))

    # 1) f32 path, auto tile size (exercises the VMEM-aware tq picker).
    out = jax.block_until_ready(mcc_layer(x, weight, bias))
    assert out.shape == (B, L, C, L), out.shape
    assert jnp.allclose(out, ref, atol=1e-4, rtol=1e-4), (
        float(jnp.max(jnp.abs(out - ref))))

    # 2) f32 path with explicit q tiling (grid (B, 4): resident-x / ds path).
    out_t = jax.block_until_ready(mcc_layer(x, weight, bias, q_tile=64))
    assert jnp.allclose(out_t, ref, atol=1e-4, rtol=1e-4), (
        float(jnp.max(jnp.abs(out_t - ref))))

    # 3) Reduced-precision fast path: bf16 MXU inputs + bf16 HBM writeback,
    #    f32 accumulation / tanh inside the kernel.  Loose tolerance vs f32 ref.
    out_bf = jax.block_until_ready(
        mcc_layer(x, weight, bias, mxu_dtype=jnp.bfloat16, out_dtype=jnp.bfloat16))
    assert out_bf.dtype == jnp.bfloat16
    assert jnp.allclose(out_bf.astype(jnp.float32), ref, atol=0.5, rtol=5e-2), (
        float(jnp.max(jnp.abs(out_bf.astype(jnp.float32) - ref))))

    # 4) bias=None path (kernel built without the bias operand).
    out_nb = jax.block_until_ready(mcc_layer(x, weight, None))
    ref_nb = jax.block_until_ready(mcc_layer_ref(x, weight, None))
    assert jnp.allclose(out_nb, ref_nb, atol=1e-4, rtol=1e-4), (
        float(jnp.max(jnp.abs(out_nb - ref_nb))))

    print("KERNEL_OK")
</pallas_src>

<mosaic_0001>
module attributes {stable_mosaic.version = 11 : i64} {
  func.func @_mcc_kernel(%arg0: i32, %arg1: i32, %arg2: memref<1x256x128xf32, #tpu.memory_space<vmem>>, %arg3: memref<128x512xf32, #tpu.memory_space<vmem>>, %arg4: memref<1x512xf32, #tpu.memory_space<vmem>>, %arg5: memref<1x256x1024xf32, #tpu.memory_space<vmem>>) attributes {dimension_semantics = [#tpu.dimension_semantics<parallel>, #tpu.dimension_semantics<parallel>], iteration_bounds = array<i64: 2, 1>, scalar_prefetch = 0 : i64, scratch_operands = 0 : i64, tpu.core_type = #tpu.core_type<tc>, window_params = [{transform_indices = @transform_0, window_bounds = array<i64: 1, 256, 128>}, {pipeline_mode = #tpu.pipeline_mode<synchronous>, transform_indices = @transform_1, window_bounds = array<i64: 128, 512>}, {pipeline_mode = #tpu.pipeline_mode<synchronous>, transform_indices = @transform_2, window_bounds = array<i64: 1, 512>}, {transform_indices = @transform_3, window_bounds = array<i64: 1, 256, 1024>}]} {
    %c0 = arith.constant 0 : index
    %c0_0 = arith.constant 0 : index
    %c0_1 = arith.constant 0 : index
    %0 = vector.load %arg2[%c0, %c0_0, %c0_1] : memref<1x256x128xf32, #tpu.memory_space<vmem>>, vector<1x256x128xf32>
    %1 = vector.shape_cast %0 : vector<1x256x128xf32> to vector<256x128xf32>
    %c0_2 = arith.constant 0 : index
    %c0_3 = arith.constant 0 : index
    %2 = vector.load %arg3[%c0_2, %c0_3] : memref<128x512xf32, #tpu.memory_space<vmem>>, vector<128x512xf32>
    %cst = arith.constant dense<0.000000e+00> : vector<256x512xf32>
    %3 = tpu.matmul %1, %2, %cst {dimension_numbers = #tpu.dot_dimension_numbers<[1], [0], [0], [1], [0, 0, 1, 1], [], []>} : vector<256x128xf32>, vector<128x512xf32>, vector<256x512xf32> -> vector<256x512xf32>
    %c0_4 = arith.constant 0 : index
    %c0_5 = arith.constant 0 : index
    %4 = vector.load %arg4[%c0_4, %c0_5] : memref<1x512xf32, #tpu.memory_space<vmem>>, vector<1x512xf32>
    %5 = vector.broadcast %4 : vector<1x512xf32> to vector<256x512xf32>
    %6 = arith.addf %3, %5 : vector<256x512xf32>
    %7 = math.tanh %6 : vector<256x512xf32>
    %8 = vector.extract_strided_slice %7 {offsets = [0, 0], sizes = [256, 128], strides = [1, 1]} : vector<256x512xf32> to vector<256x128xf32>
    %cst_6 = arith.constant dense<0.000000e+00> : vector<256x256xf32>
    %9 = tpu.matmul %8, %1, %cst_6 {dimension_numbers = #tpu.dot_dimension_numbers<[1], [1], [0], [0], [0, 0, 1, 0], [], []>} : vector<256x128xf32>, vector<256x128xf32>, vector<256x256xf32> -> vector<256x256xf32>
    %c0_7 = arith.constant 0 : index
    %c0_8 = arith.constant 0 : index
    %c0_9 = arith.constant 0 : index
    %10 = vector.load %arg5[%c0_7, %c0_8, %c0_9] : memref<1x256x1024xf32, #tpu.memory_space<vmem>>, vector<1x256x256xf32>
    %11 = vector.shape_cast %10 : vector<1x256x256xf32> to vector<256x256xf32>
    %12 = vector.shape_cast %9 : vector<256x256xf32> to vector<1x256x256xf32>
    tpu.vector_store %arg5[%c0_7, %c0_8, %c0_9], %12 {strides = array<i32>} : memref<1x256x1024xf32, #tpu.memory_space<vmem>>, vector<1x256x256xf32>,
    %13 = vector.extract_strided_slice %7 {offsets = [0, 128], sizes = [256, 128], strides = [1, 1]} : vector<256x512xf32> to vector<256x128xf32>
    %cst_10 = arith.constant dense<0.000000e+00> : vector<256x256xf32>
    %14 = tpu.matmul %13, %1, %cst_10 {dimension_numbers = #tpu.dot_dimension_numbers<[1], [1], [0], [0], [0, 0, 1, 0], [], []>} : vector<256x128xf32>, vector<256x128xf32>, vector<256x256xf32> -> vector<256x256xf32>
    %c0_11 = arith.constant 0 : index
    %c0_12 = arith.constant 0 : index
    %c256 = arith.constant 256 : index
    %15 = vector.load %arg5[%c0_11, %c0_12, %c256] : memref<1x256x1024xf32, #tpu.memory_space<vmem>>, vector<1x256x256xf32>
    %16 = vector.shape_cast %15 : vector<1x256x256xf32> to vector<256x256xf32>
    %17 = vector.shape_cast %14 : vector<256x256xf32> to vector<1x256x256xf32>
    tpu.vector_store %arg5[%c0_11, %c0_12, %c256], %17 {strides = array<i32>} : memref<1x256x1024xf32, #tpu.memory_space<vmem>>, vector<1x256x256xf32>,
    %18 = vector.extract_strided_slice %7 {offsets = [0, 256], sizes = [256, 128], strides = [1, 1]} : vector<256x512xf32> to vector<256x128xf32>
    %cst_13 = arith.constant dense<0.000000e+00> : vector<256x256xf32>
    %19 = tpu.matmul %18, %1, %cst_13 {dimension_numbers = #tpu.dot_dimension_numbers<[1], [1], [0], [0], [0, 0, 1, 0], [], []>} : vector<256x128xf32>, vector<256x128xf32>, vector<256x256xf32> -> vector<256x256xf32>
    %c0_14 = arith.constant 0 : index
    %c0_15 = arith.constant 0 : index
    %c512 = arith.constant 512 : index
    %20 = vector.load %arg5[%c0_14, %c0_15, %c512] : memref<1x256x1024xf32, #tpu.memory_space<vmem>>, vector<1x256x256xf32>
    %21 = vector.shape_cast %20 : vector<1x256x256xf32> to vector<256x256xf32>
    %22 = vector.shape_cast %19 : vector<256x256xf32> to vector<1x256x256xf32>
    tpu.vector_store %arg5[%c0_14, %c0_15, %c512], %22 {strides = array<i32>} : memref<1x256x1024xf32, #tpu.memory_space<vmem>>, vector<1x256x256xf32>,
    %23 = vector.extract_strided_slice %7 {offsets = [0, 384], sizes = [256, 128], strides = [1, 1]} : vector<256x512xf32> to vector<256x128xf32>
    %cst_16 = arith.constant dense<0.000000e+00> : vector<256x256xf32>
    %24 = tpu.matmul %23, %1, %cst_16 {dimension_numbers = #tpu.dot_dimension_numbers<[1], [1], [0], [0], [0, 0, 1, 0], [], []>} : vector<256x128xf32>, vector<256x128xf32>, vector<256x256xf32> -> vector<256x256xf32>
    %c0_17 = arith.constant 0 : index
    %c0_18 = arith.constant 0 : index
    %c768 = arith.constant 768 : index
    %25 = vector.load %arg5[%c0_17, %c0_18, %c768] : memref<1x256x1024xf32, #tpu.memory_space<vmem>>, vector<1x256x256xf32>
    %26 = vector.shape_cast %25 : vector<1x256x256xf32> to vector<256x256xf32>
    %27 = vector.shape_cast %24 : vector<256x256xf32> to vector<1x256x256xf32>
    tpu.vector_store %arg5[%c0_17, %c0_18, %c768], %27 {strides = array<i32>} : memref<1x256x1024xf32, #tpu.memory_space<vmem>>, vector<1x256x256xf32>,
    return
  }
  func.func @transform_0(%arg0: i32, %arg1: i32) -> (i32, i32, i32) {
    %c0_i32 = arith.constant 0 : i32
    %c0_i32_0 = arith.constant 0 : i32
    %c0_i32_1 = arith.constant 0 : i32
    return %arg0, %c0_i32, %c0_i32_0 : i32, i32, i32
  }
  func.func @transform_1(%arg0: i32, %arg1: i32) -> (i32, i32) {
    %c0_i32 = arith.constant 0 : i32
    %c0_i32_0 = arith.constant 0 : i32
    %c0_i32_1 = arith.constant 0 : i32
    return %c0_i32, %c0_i32_0 : i32, i32
  }
  func.func @transform_2(%arg0: i32, %arg1: i32) -> (i32, i32) {
    %c0_i32 = arith.constant 0 : i32
    %c0_i32_0 = arith.constant 0 : i32
    %c0_i32_1 = arith.constant 0 : i32
    return %c0_i32, %c0_i32_0 : i32, i32
  }
  func.func @transform_3(%arg0: i32, %arg1: i32) -> (i32, i32, i32) {
    %c0_i32 = arith.constant 0 : i32
    %c0_i32_0 = arith.constant 0 : i32
    return %arg0, %arg1, %c0_i32 : i32, i32, i32
  }
}

</mosaic_0001>

<llo_original>
// kernel: tpu_custom_call.1
$region0: #{tpu_custom_call.1}
  #allocation0 [shape = 'u32[]', space=smem, size = 0x4, offset = 0x4, fixed_abs, tag = 'smem constant byte address 0x4 - core index']
  #allocation1 [shape = 'u32[144,128]{1,0:T(1,128)}', space=vmem, size = 0x12000, scoped, tag = 'internal scratch']
  %s0 = inlined_call_operand.hbm [shape: f32[2,256,128], index: 0, kind: input, shape index: {}]
  %s1 = inlined_call_operand.hbm [shape: f32[128,512], index: 1, kind: input, shape index: {}]
  %s2 = inlined_call_operand.hbm [shape: f32[1,512], index: 2, kind: input, shape index: {}]
  %s3 = inlined_call_operand.hbm [shape: f32[2,256,1024], index: 3, kind: output, shape index: {}]
  %s4 = sld [smem:[#allocation0]]
  $region57: #{tpu_custom_call.1} parent=0
    _
  %s6 = ssub.s32 1, %s4
  %s7 = scalar_select 0, %s6, %s4
  $region1: #{tpu_custom_call.1} parent=0
    #allocation2 [shape = 'u8[262144]{0}', space=vmem, size = 0x40000, scoped, tag = 'input window, operand 0']
    #allocation3 [shape = 's32[2]{0}', space=sflag, size = 0x8, scoped, tag = 'scoped memory for tpu_custom_call.1']
    #allocation4 [shape = 's32[2]{0}', space=sflag, size = 0x8, scoped, tag = 'scoped memory for tpu_custom_call.1']
    #allocation5 [shape = 'u8[262144]{0}', space=vmem, size = 0x40000, scoped, tag = 'input window, operand 1, single buffered']
    #allocation6 [shape = 's32[1]{0}', space=sflag, size = 0x4, scoped, tag = 'scoped memory for tpu_custom_call.1']
    #allocation7 [shape = 'u8[2048]{0}', space=vmem, size = 0x800, scoped, tag = 'input window, operand 2, single buffered']
    #allocation8 [shape = 'u8[2097152]{0}', space=vmem, size = 0x200000, scoped, tag = 'output window, operand 0']
    %8 = vsyncpa [#allocation3], 0
    %s9 = scalar_lea.sflag [#allocation3], 1
    %10 = vsyncpa %s9, 0
    %11 = vsyncpa [#allocation6], 0
    %12 = vsyncpa [#allocation4], 0
    %s13 = scalar_lea.sflag [#allocation4], 1
    %14 = vsyncpa %s13, 0
    loop: start=0, step=1, limit=4
    $region2: #{tpu_custom_call.1} parent=1 // loop_pre_header
      _
    $region3: #{tpu_custom_call.1} parent=1 // loop_header
      %s16 = sphi 0, %s20
      %p17 = scmp.ge.s32.totalorder %s16, 4
      %s23 = sphi 0, %s35
      %s24 = sphi 0, %s31
      %s25 = sphi 0, %s23
      %s26 = sphi 0, %s24
      %s27 = sphi 0, %s25
      %s28 = sphi 0, %s26
      %s38 = sphi 0, %s40
      %s41 = sphi 0, %s38
      %s42 = sphi 0, %s41
      %s58 = sphi 0, %s42
      %s62 = sphi 0, %s62
      %s64 = sphi 0, %s62
      %s65 = sphi 0, %s64
      %s79 = sphi 0, %s65
      %s83 = sphi 0, %s83
      %s85 = sphi 0, %s83
      %s86 = sphi 0, %s85
      %s100 = sphi 0, %s86
      %s108 = sphi 0, %s110
      %s111 = sphi 0, %s108
      %s112 = sphi 0, %s111
      %s128 = sphi 0, %s112
    $region4: #{tpu_custom_call.1} parent=1 // loop_header_branch
      %19 = sbr.rel (%p17) target = $region8
    $region5: #{tpu_custom_call.1} parent=1 // loop_body
      %s21 = ssub.s32 %s16, 1
      %s22 = ssub.s32 %s16, 2
      %s29 = sadd.s32 1, %s24
      %p30 = scmp.ge.s32.totalorder %s29, 1
      %s31 = scalar_select %p30, 0, %s29
      %s32 = sadd.s32 1, %s23
      %s33 = scalar_select %p30, %s32, %s23
      %p34 = scmp.ge.s32.totalorder %s33, 2
      %s35 = scalar_select %p34, 0, %s33
      %s36 = ssub.s32 %s23, %s35
      %p37 = scmp.eq.s32.totalorder %s36, 0
      %s39 = sadd.s32 %s38, 1
      %s40 = scalar_select %p37, %s38, %s39
      %p43 = pneg %p37
      %p44 = scmp.eq.s32.totalorder %s16, 1
      %p45 = por %p43, %p44
      %p46 = scmp.ne.s32.totalorder %s38, %s41
      %p47 = scmp.eq.s32.totalorder %s16, 0
      %p48 = por %p46, %p47
      %p49 = scmp.ne.s32.totalorder %s38, %s41
      %p50 = scmp.eq.s32.totalorder %s21, 1
      %p51 = por %p49, %p50
      %p52 = scmp.ne.s32.totalorder %s41, %s42
      %p53 = scmp.eq.s32.totalorder %s21, 0
      %p54 = por %p52, %p53
      %p55 = scmp.ne.s32.totalorder %s41, %s42
      %p56 = scmp.eq.s32.totalorder %s22, 1
      %p57 = por %p55, %p56
      %p59 = scmp.ne.s32.totalorder %s42, %s58
      %p60 = scmp.eq.s32.totalorder %s22, 0
      %p61 = por %p59, %p60
      %s63 = sadd.s32 %s62, 1
      %p66 = scmp.eq.s32.totalorder %s16, 1
      %p67 = scmp.ne.s32.totalorder %s62, %s64
      %p68 = scmp.eq.s32.totalorder %s16, 0
      %p69 = por %p67, %p68
      %p70 = scmp.ne.s32.totalorder %s62, %s64
      %p71 = scmp.eq.s32.totalorder %s21, 1
      %p72 = por %p70, %p71
      %p73 = scmp.ne.s32.totalorder %s64, %s65
      %p74 = scmp.eq.s32.totalorder %s21, 0
      %p75 = por %p73, %p74
      %p76 = scmp.ne.s32.totalorder %s64, %s65
      %p77 = scmp.eq.s32.totalorder %s22, 1
      %p78 = por %p76, %p77
      %p80 = scmp.ne.s32.totalorder %s65, %s79
      %p81 = scmp.eq.s32.totalorder %s22, 0
      %p82 = por %p80, %p81
      %s84 = sadd.s32 %s83, 1
      %p87 = scmp.eq.s32.totalorder %s16, 1
      %p88 = scmp.ne.s32.totalorder %s83, %s85
      %p89 = scmp.eq.s32.totalorder %s16, 0
      %p90 = por %p88, %p89
      %p91 = scmp.ne.s32.totalorder %s83, %s85
      %p92 = scmp.eq.s32.totalorder %s21, 1
      %p93 = por %p91, %p92
      %p94 = scmp.ne.s32.totalorder %s85, %s86
      %p95 = scmp.eq.s32.totalorder %s21, 0
      %p96 = por %p94, %p95
      %p97 = scmp.ne.s32.totalorder %s85, %s86
      %p98 = scmp.eq.s32.totalorder %s22, 1
      %p99 = por %p97, %p98
      %p101 = scmp.ne.s32.totalorder %s86, %s100
      %p102 = scmp.eq.s32.totalorder %s22, 0
      %p103 = por %p101, %p102
      %s104 = ssub.s32 %s23, %s35
      %s105 = ssub.s32 %s24, %s31
      %s106 = sor.u32 %s104, %s105
      %p107 = scmp.eq.s32.totalorder %s106, 0
      %s109 = sadd.s32 %s108, 1
      %s110 = scalar_select %p107, %s108, %s109
      %p113 = pneg %p107
      %p114 = scmp.eq.s32.totalorder %s16, 1
      %p115 = por %p113, %p114
      %p116 = scmp.ne.s32.totalorder %s108, %s111
      %p117 = scmp.eq.s32.totalorder %s16, 0
      %p118 = por %p116, %p117
      %p119 = scmp.ne.s32.totalorder %s108, %s111
      %p120 = scmp.eq.s32.totalorder %s21, 1
      %p121 = por %p119, %p120
      %p122 = scmp.ne.s32.totalorder %s111, %s112
      %p123 = scmp.eq.s32.totalorder %s21, 0
      %p124 = por %p122, %p123
      %p125 = scmp.ne.s32.totalorder %s111, %s112
      %p126 = scmp.eq.s32.totalorder %s22, 1
      %p127 = por %p125, %p126
      %p129 = scmp.ne.s32.totalorder %s112, %s128
      %p130 = scmp.eq.s32.totalorder %s22, 0
      %p131 = por %p129, %p130
      %p132 = scmp.le.s32.totalorder 1, %s16
      %p133 = scmp.lt.s32.totalorder %s16, 3
      %p134 = pnand %p132, %p133
      %p135 = pneg %p134
      // Predicated region
      $region9: #{tpu_custom_call.1} parent=5 // pred_check
        _
      $region10: #{tpu_custom_call.1} parent=5 // pred_check_branch
        %137 = sbr.rel (%p134) target = $region12
      $region11: #{tpu_custom_call.1} parent=5 // pred_region
        %s138 = ssub.s32 %s16, 1
        // Predicated region
        $region13: #{tpu_custom_call.1} parent=11 // pred_check
          %p139 = pneg %p75
        $region14: #{tpu_custom_call.1} parent=11 // pred_check_branch
          %141 = sbr.rel (%p139) target = $region16
        $region15: #{tpu_custom_call.1} parent=11 // pred_region
          %s143 = ssub.s32 8192, 8192
          %144 = vsyncadd [#allocation6], %s143
          %s145 = sshll.u32 [#allocation5], 4
          %s146 = int_to_ptr.vmem [resolvable:$true] %s145
          %151 = dma.hbm_to_vmem [thread:$0]  %s1, 8192, %s146, [#allocation6], 512, 512, 32
        $region16: #{tpu_custom_call.1} parent=11 // pred_fallthru
          _
        // Predicated region
        $region17: #{tpu_custom_call.1} parent=11 // pred_check
          %p152 = pneg %p96
        $region18: #{tpu_custom_call.1} parent=11 // pred_check_branch
          %154 = sbr.rel (%p152) target = $region20
        $region19: #{tpu_custom_call.1} parent=11 // pred_region
          %s156 = ssub.s32 64, 64
          %157 = vsyncadd [#allocation6], %s156
          %s159 = sshll.u32 [#allocation7], 4
          %s160 = int_to_ptr.vmem [resolvable:$true] %s159
          %162 = dma.hbm_to_vmem [thread:$0]  %s2, 64, %s160, [#allocation6]
        $region20: #{tpu_custom_call.1} parent=11 // pred_fallthru
          _
      $region12: #{tpu_custom_call.1} parent=5 // pred_fallthru
        _
      %p163 = scmp.lt.s32.totalorder %s16, 2
      // Predicated region
      $region21: #{tpu_custom_call.1} parent=5 // pred_check
        %p164 = pneg %p163
      $region22: #{tpu_custom_call.1} parent=5 // pred_check_branch
        %166 = sbr.rel (%p164) target = $region24
      $region23: #{tpu_custom_call.1} parent=5 // pred_region
        // Predicated region
        $region25: #{tpu_custom_call.1} parent=23 // pred_check
          %p167 = pneg %p48
        $region26: #{tpu_custom_call.1} parent=23 // pred_check_branch
          %169 = sbr.rel (%p167) target = $region28
        $region27: #{tpu_custom_call.1} parent=23 // pred_region
          %s170 = sand.u32 %s38, 1
          %s171 = scalar_lea.sflag [#allocation3], %s170
          %s172 = sand.u32 %s38, 1
          %s173 = smul.addr %s172, 256
          %s174 = scalar_lea.vmem [#allocation2], %s173
          %s176 = ssub.s32 4096, 4096
          %177 = vsyncadd %s171, %s176
          %s178 = smul.addr %s23, 32
          %s179 = smul.addr %s178, 128
          %s180 = scalar_lea.hbm %s0, %s179
          %s181 = sshll.u32 %s174, 4
          %s182 = int_to_ptr.vmem [resolvable:$true] %s181
          %187 = dma.hbm_to_vmem [thread:$0]  %s180, 4096, %s182, %s171, 128, 128, 8
        $region28: #{tpu_custom_call.1} parent=23 // pred_fallthru
          _
      $region24: #{tpu_custom_call.1} parent=5 // pred_fallthru
        _
      %p188 = scmp.le.s32.totalorder 1, %s16
      %p189 = scmp.lt.s32.totalorder %s16, 3
      %p190 = pnand %p188, %p189
      %p191 = pneg %p190
      // Predicated region
      $region29: #{tpu_custom_call.1} parent=5 // pred_check
        _
      $region30: #{tpu_custom_call.1} parent=5 // pred_check_branch
        %193 = sbr.rel (%p190) target = $region32
      $region31: #{tpu_custom_call.1} parent=5 // pred_region
        %s194 = ssub.s32 %s16, 1
        %s195 = sand.u32 %s41, 1
        %s196 = scalar_lea.sflag [#allocation3], %s195
        %s197 = sand.u32 %s41, 1
        %s198 = smul.addr %s197, 256
        %s199 = scalar_lea.vmem [#allocation2], %s198
        // Predicated region
        $region33: #{tpu_custom_call.1} parent=31 // pred_check
          %p200 = pneg %p54
        $region34: #{tpu_custom_call.1} parent=31 // pred_check_branch
          %202 = sbr.rel (%p200) target = $region36
        $region35: #{tpu_custom_call.1} parent=31 // pred_region
          %203 = dma.done %s196, 4096
        $region36: #{tpu_custom_call.1} parent=31 // pred_fallthru
          _
        // Predicated region
        $region37: #{tpu_custom_call.1} parent=31 // pred_check
          %p204 = pneg %p75
        $region38: #{tpu_custom_call.1} parent=31 // pred_check_branch
          %206 = sbr.rel (%p204) target = $region40
        $region39: #{tpu_custom_call.1} parent=31 // pred_region
          %207 = dma.done [#allocation6], 8192
        $region40: #{tpu_custom_call.1} parent=31 // pred_fallthru
          _
        // Predicated region
        $region41: #{tpu_custom_call.1} parent=31 // pred_check
          %p208 = pneg %p96
        $region42: #{tpu_custom_call.1} parent=31 // pred_check_branch
          %210 = sbr.rel (%p208) target = $region44
        $region43: #{tpu_custom_call.1} parent=31 // pred_region
          %211 = dma.done [#allocation6], 64
        $region44: #{tpu_custom_call.1} parent=31 // pred_fallthru
          _
        %s212 = sand.u32 %s41, 1
        %s213 = scalar_lea.sflag [#allocation3], %s212
        %s214 = sand.u32 %s41, 1
        %s215 = smul.addr %s214, 256
        %s216 = scalar_lea.vmem [#allocation2], %s215
        %p217 = pneg %p54
        %p218 = pneg %p51
        %p219 = pneg %p75
        %p220 = pneg %p72
        %p221 = pneg %p96
        %p222 = pneg %p93
        %p223 = pneg %p124
        %p224 = pneg %p121
        %s225 = sand.u32 %s111, 1
        %s226 = scalar_lea.sflag [#allocation4], %s225
        %s227 = sand.u32 %s111, 1
        %s228 = smul.addr %s227, 2048
        %s229 = scalar_lea.vmem [#allocation8], %s228
        %s230 = smul.u32 32, %s26
        %v231 = vld [vmem:[%s199] sm:$0xff]
        %v232 = vld [vmem:[%s199 + $0x8] sm:$0xff]
        %v233 = vld [vmem:[%s199 + $0x10] sm:$0xff]
        %v234 = vld [vmem:[%s199 + $0x18] sm:$0xff]
        %v235 = vld [vmem:[%s199 + $0x20] sm:$0xff]
        %v236 = vld [vmem:[%s199 + $0x28] sm:$0xff]
        %v237 = vld [vmem:[%s199 + $0x30] sm:$0xff]
        %v238 = vld [vmem:[%s199 + $0x38] sm:$0xff]
        %v239 = vld [vmem:[%s199 + $0x40] sm:$0xff]
        %v240 = vld [vmem:[%s199 + $0x48] sm:$0xff]
        %v241 = vld [vmem:[%s199 + $0x50] sm:$0xff]
        %v242 = vld [vmem:[%s199 + $0x58] sm:$0xff]
        %v243 = vld [vmem:[%s199 + $0x60] sm:$0xff]
        %v244 = vld [vmem:[%s199 + $0x68] sm:$0xff]
        %v245 = vld [vmem:[%s199 + $0x70] sm:$0xff]
        %v246 = vld [vmem:[%s199 + $0x78] sm:$0xff]
        %v247 = vld [vmem:[%s199 + $0x80] sm:$0xff]
        %v248 = vld [vmem:[%s199 + $0x88] sm:$0xff]
        %v249 = vld [vmem:[%s199 + $0x90] sm:$0xff]
        %v250 = vld [vmem:[%s199 + $0x98] sm:$0xff]
        %v251 = vld [vmem:[%s199 + $0xa0] sm:$0xff]
        %v252 = vld [vmem:[%s199 + $0xa8] sm:$0xff]
        %v253 = vld [vmem:[%s199 + $0xb0] sm:$0xff]
        %v254 = vld [vmem:[%s199 + $0xb8] sm:$0xff]
        %v255 = vld [vmem:[%s199 + $0xc0] sm:$0xff]
        %v256 = vld [vmem:[%s199 + $0xc8] sm:$0xff]
        %v257 = vld [vmem:[%s199 + $0xd0] sm:$0xff]
        %v258 = vld [vmem:[%s199 + $0xd8] sm:$0xff]
        %v259 = vld [vmem:[%s199 + $0xe0] sm:$0xff]
        %v260 = vld [vmem:[%s199 + $0xe8] sm:$0xff]
        %v261 = vld [vmem:[%s199 + $0xf0] sm:$0xff]
        %v262 = vld [vmem:[%s199 + $0xf8] sm:$0xff]
        %v263 = vld [vmem:[#allocation5] sm:$0xff]
        %v264 = vld [vmem:[#allocation5 + $0x8] sm:$0xff]
        %v265 = vld [vmem:[#allocation5 + $0x10] sm:$0xff]
        %v266 = vld [vmem:[#allocation5 + $0x18] sm:$0xff]
        %v267 = vld [vmem:[#allocation5 + $0x20] sm:$0xff]
        %v268 = vld [vmem:[#allocation5 + $0x28] sm:$0xff]
        %v269 = vld [vmem:[#allocation5 + $0x30] sm:$0xff]
        %v270 = vld [vmem:[#allocation5 + $0x38] sm:$0xff]
        %v271 = vld [vmem:[#allocation5 + $0x40] sm:$0xff]
        %v272 = vld [vmem:[#allocation5 + $0x48] sm:$0xff]
        %v273 = vld [vmem:[#allocation5 + $0x50] sm:$0xff]
        %v274 = vld [vmem:[#allocation5 + $0x58] sm:$0xff]
        %v275 = vld [vmem:[#allocation5 + $0x60] sm:$0xff]
        %v276 = vld [vmem:[#allocation5 + $0x68] sm:$0xff]
        %v277 = vld [vmem:[#allocation5 + $0x70] sm:$0xff]
        %v278 = vld [vmem:[#allocation5 + $0x78] sm:$0xff]
        %v279 = vld [vmem:[#allocation5 + $0x80] sm:$0xff]
        %v280 = vld [vmem:[#allocation5 + $0x88] sm:$0xff]
        %v281 = vld [vmem:[#allocation5 + $0x90] sm:$0xff]
        %v282 = vld [vmem:[#allocation5 + $0x98] sm:$0xff]
        %v283 = vld [vmem:[#allocation5 + $0xa0] sm:$0xff]
        %v284 = vld [vmem:[#allocation5 + $0xa8] sm:$0xff]
        %v285 = vld [vmem:[#allocation5 + $0xb0] sm:$0xff]
        %v286 = vld [vmem:[#allocation5 + $0xb8] sm:$0xff]
        %v287 = vld [vmem:[#allocation5 + $0xc0] sm:$0xff]
        %v288 = vld [vmem:[#allocation5 + $0xc8] sm:$0xff]
        %v289 = vld [vmem:[#allocation5 + $0xd0] sm:$0xff]
        %v290 = vld [vmem:[#allocation5 + $0xd8] sm:$0xff]
        %v291 = vld [vmem:[#allocation5 + $0xe0] sm:$0xff]
        %v292 = vld [vmem:[#allocation5 + $0xe8] sm:$0xff]
        %v293 = vld [vmem:[#allocation5 + $0xf0] sm:$0xff]
        %v294 = vld [vmem:[#allocation5 + $0xf8] sm:$0xff]
        %v295 = vld [vmem:[#allocation5 + $0x100] sm:$0xff]
        %v296 = vld [vmem:[#allocation5 + $0x108] sm:$0xff]
        %v297 = vld [vmem:[#allocation5 + $0x110] sm:$0xff]
        %v298 = vld [vmem:[#allocation5 + $0x118] sm:$0xff]
        %v299 = vld [vmem:[#allocation5 + $0x120] sm:$0xff]
        %v300 = vld [vmem:[#allocation5 + $0x128] sm:$0xff]
        %v301 = vld [vmem:[#allocation5 + $0x130] sm:$0xff]
        %v302 = vld [vmem:[#allocation5 + $0x138] sm:$0xff]
        %v303 = vld [vmem:[#allocation5 + $0x140] sm:$0xff]
        %v304 = vld [vmem:[#allocation5 + $0x148] sm:$0xff]
        %v305 = vld [vmem:[#allocation5 + $0x150] sm:$0xff]
        %v306 = vld [vmem:[#allocation5 + $0x158] sm:$0xff]
        %v307 = vld [vmem:[#allocation5 + $0x160] sm:$0xff]
        %v308 = vld [vmem:[#allocation5 + $0x168] sm:$0xff]
        %v309 = vld [vmem:[#allocation5 + $0x170] sm:$0xff]
        %v310 = vld [vmem:[#allocation5 + $0x178] sm:$0xff]
        %v311 = vld [vmem:[#allocation5 + $0x180] sm:$0xff]
        %v312 = vld [vmem:[#allocation5 + $0x188] sm:$0xff]
        %v313 = vld [vmem:[#allocation5 + $0x190] sm:$0xff]
        %v314 = vld [vmem:[#allocation5 + $0x198] sm:$0xff]
        %v315 = vld [vmem:[#allocation5 + $0x1a0] sm:$0xff]
        %v316 = vld [vmem:[#allocation5 + $0x1a8] sm:$0xff]
        %v317 = vld [vmem:[#allocation5 + $0x1b0] sm:$0xff]
        %v318 = vld [vmem:[#allocation5 + $0x1b8] sm:$0xff]
        %v319 = vld [vmem:[#allocation5 + $0x1c0] sm:$0xff]
        %v320 = vld [vmem:[#allocation5 + $0x1c8] sm:$0xff]
        %v321 = vld [vmem:[#allocation5 + $0x1d0] sm:$0xff]
        %v322 = vld [vmem:[#allocation5 + $0x1d8] sm:$0xff]
        %v323 = vld [vmem:[#allocation5 + $0x1e0] sm:$0xff]
        %v324 = vld [vmem:[#allocation5 + $0x1e8] sm:$0xff]
        %v325 = vld [vmem:[#allocation5 + $0x1f0] sm:$0xff]
        %v326 = vld [vmem:[#allocation5 + $0x1f8] sm:$0xff]
        %v327 = vld [vmem:[#allocation7] sm:$0xf]
        %v329 = vlaneseq
        %v330 = vshrl.u32 %v329, 7
        %v331 = vsub.s32 0, %v330
        %v332 = vrot.slane %v327, %v331
        %v333 = vlaneseq
        %v334 = vshrl.u32 %v333, 7
        %v335 = vsub.s32 1, %v334
        %v336 = vrot.slane %v327, %v335
        %v337 = vlaneseq
        %v338 = vshrl.u32 %v337, 7
        %v339 = vsub.s32 2, %v338
        %v340 = vrot.slane %v327, %v339
        %v341 = vlaneseq
        %v342 = vshrl.u32 %v341, 7
        %v343 = vsub.s32 3, %v342
        %v344 = vrot.slane %v327, %v343
        %349 = vmatprep.subr.mxu0 %v264
        %350 = vmatpush1.msra.mxu0 %v263
        %351 = vmatprep.subr.mxu0 %v268
        %352 = vmatpush1.msra.mxu0 %v267
        %353 = vmatprep.subr.mxu0 %v272
        %354 = vmatpush1.msra.mxu0 %v271
        %355 = vmatprep.subr.mxu0 %v276
        %356 = vmatpush1.msra.mxu0 %v275
        %357 = vmatprep.subr.mxu0 %v280
        %358 = vmatpush1.msra.mxu0 %v279
        %359 = vmatprep.subr.mxu0 %v284
        %360 = vmatpush1.msra.mxu0 %v283
        %361 = vmatprep.subr.mxu0 %v288
        %362 = vmatpush1.msra.mxu0 %v287
        %363 = vmatprep.subr.mxu0 %v292
        %364 = vmatpush1.msra.mxu0 %v291
        %365 = vmatprep.subr.mxu0 %v296
        %366 = vmatpush1.msra.mxu0 %v295
        %367 = vmatprep.subr.mxu0 %v300
        %368 = vmatpush1.msra.mxu0 %v299
        %369 = vmatprep.subr.mxu0 %v304
        %370 = vmatpush1.msra.mxu0 %v303
        %371 = vmatprep.subr.mxu0 %v308
        %372 = vmatpush1.msra.mxu0 %v307
        %373 = vmatprep.subr.mxu0 %v312
        %374 = vmatpush1.msra.mxu0 %v311
        %375 = vmatprep.subr.mxu0 %v316
        %376 = vmatpush1.msra.mxu0 %v315
        %377 = vmatprep.subr.mxu0 %v320
        %378 = vmatpush1.msra.mxu0 %v319
        %379 = vmatprep.subr.mxu0 %v324
        %380 = vmatpush1.msra.mxu0 %v323
        %381 = vmatprep.subr.mxu0 0.0
        %382 = vmatpush1.msra.mxu0 0.0
        %383 = vmatprep.subr.mxu0 0.0
        %384 = vmatpush1.msra.mxu0 0.0
        %385 = vmatprep.subr.mxu0 0.0
        %386 = vmatpush1.msra.mxu0 0.0
        %387 = vmatprep.subr.mxu0 0.0
        %388 = vmatpush1.msra.mxu0 0.0
        %389 = vmatprep.subr.mxu0 0.0
        %390 = vmatpush1.msra.mxu0 0.0
        %391 = vmatprep.subr.mxu0 0.0
        %392 = vmatpush1.msra.mxu0 0.0
        %393 = vmatprep.subr.mxu0 0.0
        %394 = vmatpush1.msra.mxu0 0.0
        %395 = vmatprep.subr.mxu0 0.0
        %396 = vmatpush1.msra.mxu0 0.0
        %397 = vmatprep.subr.mxu0 0.0
        %398 = vmatpush1.msra.mxu0 0.0
        %399 = vmatprep.subr.mxu0 0.0
        %400 = vmatpush1.msra.mxu0 0.0
        %401 = vmatprep.subr.mxu0 0.0
        %402 = vmatpush1.msra.mxu0 0.0
        %403 = vmatprep.subr.mxu0 0.0
        %404 = vmatpush1.msra.mxu0 0.0
        %405 = vmatprep.subr.mxu0 0.0
        %406 = vmatpush1.msra.mxu0 0.0
        %407 = vmatprep.subr.mxu0 0.0
        %408 = vmatpush1.msra.mxu0 0.0
        %409 = vmatprep.subr.mxu0 0.0
        %410 = vmatpush1.msra.mxu0 0.0
        %411 = vmatprep.subr.mxu0 0.0
        %412 = vmatpush1.msra.mxu0 0.0
        %413 = vmatprep.mubr.f32.mxu0 0.0
        %414 = vmatmul.mubr.f32.gmra.mrb[0].mxu0 %v231
        %v415 = vpop.f32.mrb[0].mxu0
        %v416 = vadd.f32 %v332, %v415
        %v417 = vpop.f32.mrb[0].mxu0
        %v418 = vadd.f32 %v336, %v417
        %419 = vmatprep.mubr.f32.mxu0 0.0
        %420 = vmatmul.mubr.f32.gmra.mrb[0].mxu0 %v232
        %v421 = vpop.f32.mrb[0].mxu0
        %v422 = vadd.f32 %v332, %v421
        %v423 = vpop.f32.mrb[0].mxu0
        %v424 = vadd.f32 %v336, %v423
        %425 = vmatprep.mubr.f32.mxu0 0.0
        %426 = vmatmul.mubr.f32.gmra.mrb[0].mxu0 %v233
        %v427 = vpop.f32.mrb[0].mxu0
        %v428 = vadd.f32 %v332, %v427
        %v429 = vpop.f32.mrb[0].mxu0
        %v430 = vadd.f32 %v336, %v429
        %431 = vmatprep.mubr.f32.mxu0 0.0
        %432 = vmatmul.mubr.f32.gmra.mrb[0].mxu0 %v234
        %v433 = vpop.f32.mrb[0].mxu0
        %v434 = vadd.f32 %v332, %v433
        %v435 = vpop.f32.mrb[0].mxu0
        %v436 = vadd.f32 %v336, %v435
        %437 = vmatprep.mubr.f32.mxu0 0.0
        %438 = vmatmul.mubr.f32.gmra.mrb[0].mxu0 %v235
        %v439 = vpop.f32.mrb[0].mxu0
        %v440 = vadd.f32 %v332, %v439
        %v441 = vpop.f32.mrb[0].mxu0
        %v442 = vadd.f32 %v336, %v441
        %443 = vmatprep.mubr.f32.mxu0 0.0
        %444 = vmatmul.mubr.f32.gmra.mrb[0].mxu0 %v236
        %v445 = vpop.f32.mrb[0].mxu0
        %v446 = vadd.f32 %v332, %v445
        %v447 = vpop.f32.mrb[0].mxu0
        %v448 = vadd.f32 %v336, %v447
        %449 = vmatprep.mubr.f32.mxu0 0.0
        %450 = vmatmul.mubr.f32.gmra.mrb[0].mxu0 %v237
        %v451 = vpop.f32.mrb[0].mxu0
        %v452 = vadd.f32 %v332, %v451
        %v453 = vpop.f32.mrb[0].mxu0
        %v454 = vadd.f32 %v336, %v453
        %455 = vmatprep.mubr.f32.mxu0 0.0
        %456 = vmatmul.mubr.f32.gmra.mrb[0].mxu0 %v238
        %v457 = vpop.f32.mrb[0].mxu0
        %v458 = vadd.f32 %v332, %v457
        %v459 = vpop.f32.mrb[0].mxu0
        %v460 = vadd.f32 %v336, %v459
        %461 = vmatprep.mubr.f32.mxu0 0.0
        %462 = vmatmul.mubr.f32.gmra.mrb[0].mxu0 %v239
        %v463 = vpop.f32.mrb[0].mxu0
        %v464 = vadd.f32 %v332, %v463
        %v465 = vpop.f32.mrb[0].mxu0
        %v466 = vadd.f32 %v336, %v465
        %467 = vmatprep.mubr.f32.mxu0 0.0
        %468 = vmatmul.mubr.f32.gmra.mrb[0].mxu0 %v240
        %v469 = vpop.f32.mrb[0].mxu0
        %v470 = vadd.f32 %v332, %v469
        %v471 = vpop.f32.mrb[0].mxu0
        %v472 = vadd.f32 %v336, %v471
        %473 = vmatprep.mubr.f32.mxu0 0.0
        %474 = vmatmul.mubr.f32.gmra.mrb[0].mxu0 %v241
        %v475 = vpop.f32.mrb[0].mxu0
        %v476 = vadd.f32 %v332, %v475
        %v477 = vpop.f32.mrb[0].mxu0
        %v478 = vadd.f32 %v336, %v477
        %479 = vmatprep.mubr.f32.mxu0 0.0
        %480 = vmatmul.mubr.f32.gmra.mrb[0].mxu0 %v242
        %v481 = vpop.f32.mrb[0].mxu0
        %v482 = vadd.f32 %v332, %v481
        %v483 = vpop.f32.mrb[0].mxu0
        %v484 = vadd.f32 %v336, %v483
        %485 = vmatprep.mubr.f32.mxu0 0.0
        %486 = vmatmul.mubr.f32.gmra.mrb[0].mxu0 %v243
        %v487 = vpop.f32.mrb[0].mxu0
        %v488 = vadd.f32 %v332, %v487
        %v489 = vpop.f32.mrb[0].mxu0
        %v490 = vadd.f32 %v336, %v489
        %491 = vmatprep.mubr.f32.mxu0 0.0
        %492 = vmatmul.mubr.f32.gmra.mrb[0].mxu0 %v244
        %v493 = vpop.f32.mrb[0].mxu0
        %v494 = vadd.f32 %v332, %v493
        %v495 = vpop.f32.mrb[0].mxu0
        %v496 = vadd.f32 %v336, %v495
        %497 = vmatprep.mubr.f32.mxu0 0.0
        %498 = vmatmul.mubr.f32.gmra.mrb[0].mxu0 %v245
        %v499 = vpop.f32.mrb[0].mxu0
        %v500 = vadd.f32 %v332, %v499
        %v501 = vpop.f32.mrb[0].mxu0
        %v502 = vadd.f32 %v336, %v501
        %503 = vmatprep.mubr.f32.mxu0 0.0
        %504 = vmatmul.mubr.f32.gmra.mrb[0].mxu0 %v246
        %v505 = vpop.f32.mrb[0].mxu0
        %v506 = vadd.f32 %v332, %v505
        %v507 = vpop.f32.mrb[0].mxu0
        %v508 = vadd.f32 %v336, %v507
        %509 = vmatprep.mubr.f32.mxu0 0.0
        %510 = vmatmul.mubr.f32.gmra.mrb[0].mxu0 %v247
        %v511 = vpop.f32.mrb[0].mxu0
        %v512 = vadd.f32 %v332, %v511
        %v513 = vpop.f32.mrb[0].mxu0
        %v514 = vadd.f32 %v336, %v513
        %515 = vmatprep.mubr.f32.mxu0 0.0
        %516 = vmatmul.mubr.f32.gmra.mrb[0].mxu0 %v248
        %v517 = vpop.f32.mrb[0].mxu0
        %v518 = vadd.f32 %v332, %v517
        %v519 = vpop.f32.mrb[0].mxu0
        %v520 = vadd.f32 %v336, %v519
        %521 = vmatprep.mubr.f32.mxu0 0.0
        %522 = vmatmul.mubr.f32.gmra.mrb[0].mxu0 %v249
        %v523 = vpop.f32.mrb[0].mxu0
        %v524 = vadd.f32 %v332, %v523
        %v525 = vpop.f32.mrb[0].mxu0
        %v526 = vadd.f32 %v336, %v525
        %527 = vmatprep.mubr.f32.mxu0 0.0
        %528 = vmatmul.mubr.f32.gmra.mrb[0].mxu0 %v250
        %v529 = vpop.f32.mrb[0].mxu0
        %v530 = vadd.f32 %v332, %v529
        %v531 = vpop.f32.mrb[0].mxu0
        %v532 = vadd.f32 %v336, %v531
        %533 = vmatprep.mubr.f32.mxu0 0.0
        %534 = vmatmul.mubr.f32.gmra.mrb[0].mxu0 %v251
        %v535 = vpop.f32.mrb[0].mxu0
        %v536 = vadd.f32 %v332, %v535
        %v537 = vpop.f32.mrb[0].mxu0
        %v538 = vadd.f32 %v336, %v537
        %539 = vmatprep.mubr.f32.mxu0 0.0
        %540 = vmatmul.mubr.f32.gmra.mrb[0].mxu0 %v252
        %v541 = vpop.f32.mrb[0].mxu0
        %v542 = vadd.f32 %v332, %v541
        %v543 = vpop.f32.mrb[0].mxu0
        %v544 = vadd.f32 %v336, %v543
        %545 = vmatprep.mubr.f32.mxu0 0.0
        %546 = vmatmul.mubr.f32.gmra.mrb[0].mxu0 %v253
        %v547 = vpop.f32.mrb[0].mxu0
        %v548 = vadd.f32 %v332, %v547
        %v549 = vpop.f32.mrb[0].mxu0
        %v550 = vadd.f32 %v336, %v549
        %551 = vmatprep.mubr.f32.mxu0 0.0
        %552 = vmatmul.mubr.f32.gmra.mrb[0].mxu0 %v254
        %v553 = vpop.f32.mrb[0].mxu0
        %v554 = vadd.f32 %v332, %v553
        %v555 = vpop.f32.mrb[0].mxu0
        %v556 = vadd.f32 %v336, %v555
        %557 = vmatprep.mubr.f32.mxu0 0.0
        %558 = vmatmul.mubr.f32.gmra.mrb[0].mxu0 %v255
        %v559 = vpop.f32.mrb[0].mxu0
        %v560 = vadd.f32 %v332, %v559
        %v561 = vpop.f32.mrb[0].mxu0
        %v562 = vadd.f32 %v336, %v561
        %563 = vmatprep.mubr.f32.mxu0 0.0
        %564 = vmatmul.mubr.f32.gmra.mrb[0].mxu0 %v256
        %v565 = vpop.f32.mrb[0].mxu0
        %v566 = vadd.f32 %v332, %v565
        %v567 = vpop.f32.mrb[0].mxu0
        %v568 = vadd.f32 %v336, %v567
        %569 = vmatprep.mubr.f32.mxu0 0.0
        %570 = vmatmul.mubr.f32.gmra.mrb[0].mxu0 %v257
        %v571 = vpop.f32.mrb[0].mxu0
        %v572 = vadd.f32 %v332, %v571
        %v573 = vpop.f32.mrb[0].mxu0
        %v574 = vadd.f32 %v336, %v573
        %575 = vmatprep.mubr.f32.mxu0 0.0
        %576 = vmatmul.mubr.f32.gmra.mrb[0].mxu0 %v258
        %v577 = vpop.f32.mrb[0].mxu0
        %v578 = vadd.f32 %v332, %v577
        %v579 = vpop.f32.mrb[0].mxu0
        %v580 = vadd.f32 %v336, %v579
        %581 = vmatprep.mubr.f32.mxu0 0.0
        %582 = vmatmul.mubr.f32.gmra.mrb[0].mxu0 %v259
        %v583 = vpop.f32.mrb[0].mxu0
        %v584 = vadd.f32 %v332, %v583
        %v585 = vpop.f32.mrb[0].mxu0
        %v586 = vadd.f32 %v336, %v585
        %587 = vmatprep.mubr.f32.mxu0 0.0
        %588 = vmatmul.mubr.f32.gmra.mrb[0].mxu0 %v260
        %v589 = vpop.f32.mrb[0].mxu0
        %v590 = vadd.f32 %v332, %v589
        %v591 = vpop.f32.mrb[0].mxu0
        %v592 = vadd.f32 %v336, %v591
        %593 = vmatprep.mubr.f32.mxu0 0.0
        %594 = vmatmul.mubr.f32.gmra.mrb[0].mxu0 %v261
        %v595 = vpop.f32.mrb[0].mxu0
        %v596 = vadd.f32 %v332, %v595
        %v597 = vpop.f32.mrb[0].mxu0
        %v598 = vadd.f32 %v336, %v597
        %599 = vmatprep.mubr.f32.mxu0 0.0
        %600 = vmatmul.mubr.f32.gmra.mrb[0].mxu0 %v262
        %v601 = vpop.f32.mrb[0].mxu0
        %v602 = vadd.f32 %v332, %v601
        %v603 = vpop.f32.mrb[0].mxu0
        %v604 = vadd.f32 %v336, %v603
        %605 = vdwg.mxu0
        %606 = vmatprep.subr.mxu0 %v266
        %607 = vmatpush1.msra.mxu0 %v265
        %608 = vmatprep.subr.mxu0 %v270
        %609 = vmatpush1.msra.mxu0 %v269
        %610 = vmatprep.subr.mxu0 %v274
        %611 = vmatpush1.msra.mxu0 %v273
        %612 = vmatprep.subr.mxu0 %v278
        %613 = vmatpush1.msra.mxu0 %v277
        %614 = vmatprep.subr.mxu0 %v282
        %615 = vmatpush1.msra.mxu0 %v281
        %616 = vmatprep.subr.mxu0 %v286
        %617 = vmatpush1.msra.mxu0 %v285
        %618 = vmatprep.subr.mxu0 %v290
        %619 = vmatpush1.msra.mxu0 %v289
        %620 = vmatprep.subr.mxu0 %v294
        %621 = vmatpush1.msra.mxu0 %v293
        %622 = vmatprep.subr.mxu0 %v298
        %623 = vmatpush1.msra.mxu0 %v297
        %624 = vmatprep.subr.mxu0 %v302
        %625 = vmatpush1.msra.mxu0 %v301
        %626 = vmatprep.subr.mxu0 %v306
        %627 = vmatpush1.msra.mxu0 %v305
        %628 = vmatprep.subr.mxu0 %v310
        %629 = vmatpush1.msra.mxu0 %v309
        %630 = vmatprep.subr.mxu0 %v314
        %631 = vmatpush1.msra.mxu0 %v313
        %632 = vmatprep.subr.mxu0 %v318
        %633 = vmatpush1.msra.mxu0 %v317
        %634 = vmatprep.subr.mxu0 %v322
        %635 = vmatpush1.msra.mxu0 %v321
        %636 = vmatprep.subr.mxu0 %v326
        %637 = vmatpush1.msra.mxu0 %v325
        %638 = vmatprep.subr.mxu0 0.0
        %639 = vmatpush1.msra.mxu0 0.0
        %640 = vmatprep.subr.mxu0 0.0
        %641 = vmatpush1.msra.mxu0 0.0
        %642 = vmatprep.subr.mxu0 0.0
        %643 = vmatpush1.msra.mxu0 0.0
        %644 = vmatprep.subr.mxu0 0.0
        %645 = vmatpush1.msra.mxu0 0.0
        %646 = vmatprep.subr.mxu0 0.0
        %647 = vmatpush1.msra.mxu0 0.0
        %648 = vmatprep.subr.mxu0 0.0
        %649 = vmatpush1.msra.mxu0 0.0
        %650 = vmatprep.subr.mxu0 0.0
        %651 = vmatpush1.msra.mxu0 0.0
        %652 = vmatprep.subr.mxu0 0.0
        %653 = vmatpush1.msra.mxu0 0.0
        %654 = vmatprep.subr.mxu0 0.0
        %655 = vmatpush1.msra.mxu0 0.0
        %656 = vmatprep.subr.mxu0 0.0
        %657 = vmatpush1.msra.mxu0 0.0
        %658 = vmatprep.subr.mxu0 0.0
        %659 = vmatpush1.msra.mxu0 0.0
        %660 = vmatprep.subr.mxu0 0.0
        %661 = vmatpush1.msra.mxu0 0.0
        %662 = vmatprep.subr.mxu0 0.0
        %663 = vmatpush1.msra.mxu0 0.0
        %664 = vmatprep.subr.mxu0 0.0
        %665 = vmatpush1.msra.mxu0 0.0
        %666 = vmatprep.subr.mxu0 0.0
        %667 = vmatpush1.msra.mxu0 0.0
        %668 = vmatprep.subr.mxu0 0.0
        %669 = vmatpush1.msra.mxu0 0.0
        %670 = vmatprep.mubr.f32.mxu0 0.0
        %671 = vmatmul.mubr.f32.gmra.mrb[0].mxu0 %v231
        %v672 = vpop.f32.mrb[0].mxu0
        %v673 = vadd.f32 %v340, %v672
        %v674 = vpop.f32.mrb[0].mxu0
        %v675 = vadd.f32 %v344, %v674
        %676 = vmatprep.mubr.f32.mxu0 0.0
        %677 = vmatmul.mubr.f32.gmra.mrb[0].mxu0 %v232
        %v678 = vpop.f32.mrb[0].mxu0
        %v679 = vadd.f32 %v340, %v678
        %v680 = vpop.f32.mrb[0].mxu0
        %v681 = vadd.f32 %v344, %v680
        %682 = vmatprep.mubr.f32.mxu0 0.0
        %683 = vmatmul.mubr.f32.gmra.mrb[0].mxu0 %v233
        %v684 = vpop.f32.mrb[0].mxu0
        %v685 = vadd.f32 %v340, %v684
        %v686 = vpop.f32.mrb[0].mxu0
        %v687 = vadd.f32 %v344, %v686
        %688 = vmatprep.mubr.f32.mxu0 0.0
        %689 = vmatmul.mubr.f32.gmra.mrb[0].mxu0 %v234
        %v690 = vpop.f32.mrb[0].mxu0
        %v691 = vadd.f32 %v340, %v690
        %v692 = vpop.f32.mrb[0].mxu0
        %v693 = vadd.f32 %v344, %v692
        %694 = vmatprep.mubr.f32.mxu0 0.0
        %695 = vmatmul.mubr.f32.gmra.mrb[0].mxu0 %v235
        %v696 = vpop.f32.mrb[0].mxu0
        %v697 = vadd.f32 %v340, %v696
        %v698 = vpop.f32.mrb[0].mxu0
        %v699 = vadd.f32 %v344, %v698
        %700 = vmatprep.mubr.f32.mxu0 0.0
        %701 = vmatmul.mubr.f32.gmra.mrb[0].mxu0 %v236
        %v702 = vpop.f32.mrb[0].mxu0
        %v703 = vadd.f32 %v340, %v702
        %v704 = vpop.f32.mrb[0].mxu0
        %v705 = vadd.f32 %v344, %v704
        %706 = vmatprep.mubr.f32.mxu0 0.0
        %707 = vmatmul.mubr.f32.gmra.mrb[0].mxu0 %v237
        %v708 = vpop.f32.mrb[0].mxu0
        %v709 = vadd.f32 %v340, %v708
        %v710 = vpop.f32.mrb[0].mxu0
        %v711 = vadd.f32 %v344, %v710
        %712 = vmatprep.mubr.f32.mxu0 0.0
        %713 = vmatmul.mubr.f32.gmra.mrb[0].mxu0 %v238
        %v714 = vpop.f32.mrb[0].mxu0
        %v715 = vadd.f32 %v340, %v714
        %v716 = vpop.f32.mrb[0].mxu0
        %v717 = vadd.f32 %v344, %v716
        %718 = vmatprep.mubr.f32.mxu0 0.0
        %719 = vmatmul.mubr.f32.gmra.mrb[0].mxu0 %v239
        %v720 = vpop.f32.mrb[0].mxu0
        %v721 = vadd.f32 %v340, %v720
        %v722 = vpop.f32.mrb[0].mxu0
        %v723 = vadd.f32 %v344, %v722
        %724 = vmatprep.mubr.f32.mxu0 0.0
        %725 = vmatmul.mubr.f32.gmra.mrb[0].mxu0 %v240
        %v726 = vpop.f32.mrb[0].mxu0
        %v727 = vadd.f32 %v340, %v726
        %v728 = vpop.f32.mrb[0].mxu0
        %v729 = vadd.f32 %v344, %v728
        %730 = vmatprep.mubr.f32.mxu0 0.0
        %731 = vmatmul.mubr.f32.gmra.mrb[0].mxu0 %v241
        %v732 = vpop.f32.mrb[0].mxu0
        %v733 = vadd.f32 %v340, %v732
        %v734 = vpop.f32.mrb[0].mxu0
        %v735 = vadd.f32 %v344, %v734
        %736 = vmatprep.mubr.f32.mxu0 0.0
        %737 = vmatmul.mubr.f32.gmra.mrb[0].mxu0 %v242
        %v738 = vpop.f32.mrb[0].mxu0
        %v739 = vadd.f32 %v340, %v738
        %v740 = vpop.f32.mrb[0].mxu0
        %v741 = vadd.f32 %v344, %v740
        %742 = vmatprep.mubr.f32.mxu0 0.0
        %743 = vmatmul.mubr.f32.gmra.mrb[0].mxu0 %v243
        %v744 = vpop.f32.mrb[0].mxu0
        %v745 = vadd.f32 %v340, %v744
        %v746 = vpop.f32.mrb[0].mxu0
        %v747 = vadd.f32 %v344, %v746
        %748 = vmatprep.mubr.f32.mxu0 0.0
        %749 = vmatmul.mubr.f32.gmra.mrb[0].mxu0 %v244
        %v750 = vpop.f32.mrb[0].mxu0
        %v751 = vadd.f32 %v340, %v750
        %v752 = vpop.f32.mrb[0].mxu0
        %v753 = vadd.f32 %v344, %v752
        %754 = vmatprep.mubr.f32.mxu0 0.0
        %755 = vmatmul.mubr.f32.gmra.mrb[0].mxu0 %v245
        %v756 = vpop.f32.mrb[0].mxu0
        %v757 = vadd.f32 %v340, %v756
        %v758 = vpop.f32.mrb[0].mxu0
        %v759 = vadd.f32 %v344, %v758
        %760 = vmatprep.mubr.f32.mxu0 0.0
        %761 = vmatmul.mubr.f32.gmra.mrb[0].mxu0 %v246
        %v762 = vpop.f32.mrb[0].mxu0
        %v763 = vadd.f32 %v340, %v762
        %v764 = vpop.f32.mrb[0].mxu0
        %v765 = vadd.f32 %v344, %v764
        %766 = vmatprep.mubr.f32.mxu0 0.0
        %767 = vmatmul.mubr.f32.gmra.mrb[0].mxu0 %v247
        %v768 = vpop.f32.mrb[0].mxu0
        %v769 = vadd.f32 %v340, %v768
        %v770 = vpop.f32.mrb[0].mxu0
        %v771 = vadd.f32 %v344, %v770
        %772 = vmatprep.mubr.f32.mxu0 0.0
        %773 = vmatmul.mubr.f32.gmra.mrb[0].mxu0 %v248
        %v774 = vpop.f32.mrb[0].mxu0
        %v775 = vadd.f32 %v340, %v774
        %v776 = vpop.f32.mrb[0].mxu0
        %v777 = vadd.f32 %v344, %v776
        %778 = vmatprep.mubr.f32.mxu0 0.0
        %779 = vmatmul.mubr.f32.gmra.mrb[0].mxu0 %v249
        %v780 = vpop.f32.mrb[0].mxu0
        %v781 = vadd.f32 %v340, %v780
        %v782 = vpop.f32.mrb[0].mxu0
        %v783 = vadd.f32 %v344, %v782
        %784 = vmatprep.mubr.f32.mxu0 0.0
        %785 = vmatmul.mubr.f32.gmra.mrb[0].mxu0 %v250
        %v786 = vpop.f32.mrb[0].mxu0
        %v787 = vadd.f32 %v340, %v786
        %v788 = vpop.f32.mrb[0].mxu0
        %v789 = vadd.f32 %v344, %v788
        %790 = vmatprep.mubr.f32.mxu0 0.0
        %791 = vmatmul.mubr.f32.gmra.mrb[0].mxu0 %v251
        %v792 = vpop.f32.mrb[0].mxu0
        %v793 = vadd.f32 %v340, %v792
        %v794 = vpop.f32.mrb[0].mxu0
        %v795 = vadd.f32 %v344, %v794
        %796 = vmatprep.mubr.f32.mxu0 0.0
        %797 = vmatmul.mubr.f32.gmra.mrb[0].mxu0 %v252
        %v798 = vpop.f32.mrb[0].mxu0
        %v799 = vadd.f32 %v340, %v798
        %v800 = vpop.f32.mrb[0].mxu0
        %v801 = vadd.f32 %v344, %v800
        %802 = vmatprep.mubr.f32.mxu0 0.0
        %803 = vmatmul.mubr.f32.gmra.mrb[0].mxu0 %v253
        %v804 = vpop.f32.mrb[0].mxu0
        %v805 = vadd.f32 %v340, %v804
        %v806 = vpop.f32.mrb[0].mxu0
        %v807 = vadd.f32 %v344, %v806
        %808 = vmatprep.mubr.f32.mxu0 0.0
        %809 = vmatmul.mubr.f32.gmra.mrb[0].mxu0 %v254
        %v810 = vpop.f32.mrb[0].mxu0
        %v811 = vadd.f32 %v340, %v810
        %v812 = vpop.f32.mrb[0].mxu0
        %v813 = vadd.f32 %v344, %v812
        %814 = vmatprep.mubr.f32.mxu0 0.0
        %815 = vmatmul.mubr.f32.gmra.mrb[0].mxu0 %v255
        %v816 = vpop.f32.mrb[0].mxu0
        %v817 = vadd.f32 %v340, %v816
        %v818 = vpop.f32.mrb[0].mxu0
        %v819 = vadd.f32 %v344, %v818
        %820 = vmatprep.mubr.f32.mxu0 0.0
        %821 = vmatmul.mubr.f32.gmra.mrb[0].mxu0 %v256
        %v822 = vpop.f32.mrb[0].mxu0
        %v823 = vadd.f32 %v340, %v822
        %v824 = vpop.f32.mrb[0].mxu0
        %v825 = vadd.f32 %v344, %v824
        %826 = vmatprep.mubr.f32.mxu0 0.0
        %827 = vmatmul.mubr.f32.gmra.mrb[0].mxu0 %v257
        %v828 = vpop.f32.mrb[0].mxu0
        %v829 = vadd.f32 %v340, %v828
        %v830 = vpop.f32.mrb[0].mxu0
        %v831 = vadd.f32 %v344, %v830
        %832 = vmatprep.mubr.f32.mxu0 0.0
        %833 = vmatmul.mubr.f32.gmra.mrb[0].mxu0 %v258
        %v834 = vpop.f32.mrb[0].mxu0
        %v835 = vadd.f32 %v340, %v834
        %v836 = vpop.f32.mrb[0].mxu0
        %v837 = vadd.f32 %v344, %v836
        %838 = vmatprep.mubr.f32.mxu0 0.0
        %839 = vmatmul.mubr.f32.gmra.mrb[0].mxu0 %v259
        %v840 = vpop.f32.mrb[0].mxu0
        %v841 = vadd.f32 %v340, %v840
        %v842 = vpop.f32.mrb[0].mxu0
        %v843 = vadd.f32 %v344, %v842
        %844 = vmatprep.mubr.f32.mxu0 0.0
        %845 = vmatmul.mubr.f32.gmra.mrb[0].mxu0 %v260
        %v846 = vpop.f32.mrb[0].mxu0
        %v847 = vadd.f32 %v340, %v846
        %v848 = vpop.f32.mrb[0].mxu0
        %v849 = vadd.f32 %v344, %v848
        %850 = vmatprep.mubr.f32.mxu0 0.0
        %851 = vmatmul.mubr.f32.gmra.mrb[0].mxu0 %v261
        %v852 = vpop.f32.mrb[0].mxu0
        %v853 = vadd.f32 %v340, %v852
        %v854 = vpop.f32.mrb[0].mxu0
        %v855 = vadd.f32 %v344, %v854
        %856 = vmatprep.mubr.f32.mxu0 0.0
        %857 = vmatmul.mubr.f32.gmra.mrb[0].mxu0 %v262
        %v858 = vpop.f32.mrb[0].mxu0
        %v859 = vadd.f32 %v340, %v858
        %v860 = vpop.f32.mrb[0].mxu0
        %v861 = vadd.f32 %v344, %v860
        %862 = vdwg.mxu0
        %v863 = vtanh.pop %v416
        %v864 = vtanh.pop %v418
        %v865 = vtanh.pop %v673
        %v866 = vtanh.pop %v675
        %v867 = vtanh.pop %v422
        %v868 = vtanh.pop %v424
        %v869 = vtanh.pop %v679
        %v870 = vtanh.pop %v681
        %v871 = vtanh.pop %v428
        %v872 = vtanh.pop %v430
        %v873 = vtanh.pop %v685
        %v874 = vtanh.pop %v687
        %v875 = vtanh.pop %v434
        %v876 = vtanh.pop %v436
        %v877 = vtanh.pop %v691
        %v878 = vtanh.pop %v693
        %v879 = vtanh.pop %v440
        %v880 = vtanh.pop %v442
        %v881 = vtanh.pop %v697
        %v882 = vtanh.pop %v699
        %v883 = vtanh.pop %v446
        %v884 = vtanh.pop %v448
        %v885 = vtanh.pop %v703
        %v886 = vtanh.pop %v705
        %v887 = vtanh.pop %v452
        %v888 = vtanh.pop %v454
        %v889 = vtanh.pop %v709
        %v890 = vtanh.pop %v711
        %v891 = vtanh.pop %v458
        %v892 = vtanh.pop %v460
        %v893 = vtanh.pop %v715
        %v894 = vtanh.pop %v717
        %v895 = vtanh.pop %v464
        %v896 = vtanh.pop %v466
        %v897 = vtanh.pop %v721
        %v898 = vtanh.pop %v723
        %v899 = vtanh.pop %v470
        %v900 = vtanh.pop %v472
        %v901 = vtanh.pop %v727
        %v902 = vtanh.pop %v729
        %v903 = vtanh.pop %v476
        %v904 = vtanh.pop %v478
        %v905 = vtanh.pop %v733
        %v906 = vtanh.pop %v735
        %v907 = vtanh.pop %v482
        %v908 = vtanh.pop %v484
        %v909 = vtanh.pop %v739
        %v910 = vtanh.pop %v741
        %v911 = vtanh.pop %v488
        %v912 = vtanh.pop %v490
        %v913 = vtanh.pop %v745
        %v914 = vtanh.pop %v747
        %v915 = vtanh.pop %v494
        %v916 = vtanh.pop %v496
        %v917 = vtanh.pop %v751
        %v918 = vtanh.pop %v753
        %v919 = vtanh.pop %v500
        %v920 = vtanh.pop %v502
        %v921 = vtanh.pop %v757
        %v922 = vtanh.pop %v759
        %v923 = vtanh.pop %v506
        %v924 = vtanh.pop %v508
        %v925 = vtanh.pop %v763
        %v926 = vtanh.pop %v765
        %v927 = vtanh.pop %v512
        %v928 = vtanh.pop %v514
        %v929 = vtanh.pop %v769
        %v930 = vtanh.pop %v771
        %v931 = vtanh.pop %v518
        %v932 = vtanh.pop %v520
        %v933 = vtanh.pop %v775
        %v934 = vtanh.pop %v777
        %v935 = vtanh.pop %v524
        %v936 = vtanh.pop %v526
        %v937 = vtanh.pop %v781
        %v938 = vtanh.pop %v783
        %v939 = vtanh.pop %v530
        %v940 = vtanh.pop %v532
        %v941 = vtanh.pop %v787
        %v942 = vtanh.pop %v789
        %v943 = vtanh.pop %v536
        %v944 = vtanh.pop %v538
        %v945 = vtanh.pop %v793
        %v946 = vtanh.pop %v795
        %v947 = vtanh.pop %v542
        %v948 = vtanh.pop %v544
        %v949 = vtanh.pop %v799
        %v950 = vtanh.pop %v801
        %v951 = vtanh.pop %v548
        %v952 = vtanh.pop %v550
        %v953 = vtanh.pop %v805
        %v954 = vtanh.pop %v807
        %v955 = vtanh.pop %v554
        %v956 = vtanh.pop %v556
        %v957 = vtanh.pop %v811
        %v958 = vtanh.pop %v813
        %v959 = vtanh.pop %v560
        %v960 = vtanh.pop %v562
        %v961 = vtanh.pop %v817
        %v962 = vtanh.pop %v819
        %v963 = vtanh.pop %v566
        %v964 = vtanh.pop %v568
        %v965 = vtanh.pop %v823
        %v966 = vtanh.pop %v825
        %v967 = vtanh.pop %v572
        %v968 = vtanh.pop %v574
        %v969 = vtanh.pop %v829
        %v970 = vtanh.pop %v831
        %v971 = vtanh.pop %v578
        %v972 = vtanh.pop %v580
        %v973 = vtanh.pop %v835
        %v974 = vtanh.pop %v837
        %v975 = vtanh.pop %v584
        %v976 = vtanh.pop %v586
        %v977 = vtanh.pop %v841
        %v978 = vtanh.pop %v843
        %v979 = vtanh.pop %v590
        %v980 = vtanh.pop %v592
        %v981 = vtanh.pop %v847
        %v982 = vtanh.pop %v849
        %v983 = vtanh.pop %v596
        %v984 = vtanh.pop %v598
        %v985 = vtanh.pop %v853
        %v986 = vtanh.pop %v855
        %v987 = vtanh.pop %v602
        %v988 = vtanh.pop %v604
        %v989 = vtanh.pop %v859
        %v990 = vtanh.pop %v861
        %991 = vmatprep.subr.mxu0 0.0
        %992 = vmatpush1.xpose.msra.mxu0 %v231
        %993 = vmatprep.subr.mxu0 0.0
        %994 = vmatpush1.xpose.msra.mxu0 %v232
        %995 = vmatprep.subr.mxu0 0.0
        %996 = vmatpush1.xpose.msra.mxu0 %v233
        %997 = vmatprep.subr.mxu0 0.0
        %998 = vmatpush1.xpose.msra.mxu0 %v234
        %999 = vmatprep.subr.mxu0 0.0
        %1000 = vmatpush1.xpose.msra.mxu0 %v235
        %1001 = vmatprep.subr.mxu0 0.0
        %1002 = vmatpush1.xpose.msra.mxu0 %v236
        %1003 = vmatprep.subr.mxu0 0.0
        %1004 = vmatpush1.xpose.msra.mxu0 %v237
        %1005 = vmatprep.subr.mxu0 0.0
        %1006 = vmatpush1.xpose.msra.mxu0 %v238
        %1007 = vmatprep.subr.mxu0 0.0
        %1008 = vmatpush1.xpose.msra.mxu0 %v239
        %1009 = vmatprep.subr.mxu0 0.0
        %1010 = vmatpush1.xpose.msra.mxu0 %v240
        %1011 = vmatprep.subr.mxu0 0.0
        %1012 = vmatpush1.xpose.msra.mxu0 %v241
        %1013 = vmatprep.subr.mxu0 0.0
        %1014 = vmatpush1.xpose.msra.mxu0 %v242
        %1015 = vmatprep.subr.mxu0 0.0
        %1016 = vmatpush1.xpose.msra.mxu0 %v243
        %1017 = vmatprep.subr.mxu0 0.0
        %1018 = vmatpush1.xpose.msra.mxu0 %v244
        %1019 = vmatprep.subr.mxu0 0.0
        %1020 = vmatpush1.xpose.msra.mxu0 %v245
        %1021 = vmatprep.subr.mxu0 0.0
        %1022 = vmatpush1.xpose.msra.mxu0 %v246
        %1023 = vmatprep.subr.mxu0 0.0
        %1024 = vmatpush1.xpose.msra.mxu0 %v247
        %1025 = vmatprep.subr.mxu0 0.0
        %1026 = vmatpush1.xpose.msra.mxu0 %v248
        %1027 = vmatprep.subr.mxu0 0.0
        %1028 = vmatpush1.xpose.msra.mxu0 %v249
        %1029 = vmatprep.subr.mxu0 0.0
        %1030 = vmatpush1.xpose.msra.mxu0 %v250
        %1031 = vmatprep.subr.mxu0 0.0
        %1032 = vmatpush1.xpose.msra.mxu0 %v251
        %1033 = vmatprep.subr.mxu0 0.0
        %1034 = vmatpush1.xpose.msra.mxu0 %v252
        %1035 = vmatprep.subr.mxu0 0.0
        %1036 = vmatpush1.xpose.msra.mxu0 %v253
        %1037 = vmatprep.subr.mxu0 0.0
        %1038 = vmatpush1.xpose.msra.mxu0 %v254
        %1039 = vmatprep.subr.mxu0 0.0
        %1040 = vmatpush1.xpose.msra.mxu0 %v255
        %1041 = vmatprep.subr.mxu0 0.0
        %1042 = vmatpush1.xpose.msra.mxu0 %v256
        %1043 = vmatprep.subr.mxu0 0.0
        %1044 = vmatpush1.xpose.msra.mxu0 %v257
        %1045 = vmatprep.subr.mxu0 0.0
        %1046 = vmatpush1.xpose.msra.mxu0 %v258
        %1047 = vmatprep.subr.mxu0 0.0
        %1048 = vmatpush1.xpose.msra.mxu0 %v259
        %1049 = vmatprep.subr.mxu0 0.0
        %1050 = vmatpush1.xpose.msra.mxu0 %v260
        %1051 = vmatprep.subr.mxu0 0.0
        %1052 = vmatpush1.xpose.msra.mxu0 %v261
        %1053 = vmatprep.subr.mxu0 0.0
        %1054 = vmatpush1.xpose.msra.mxu0 %v262
        %1055 = vmatprep.mubr.f32.mxu0 0.0
        %1056 = vmatmul.mubr.f32.gmra.mrb[0].mxu0 %v863
        %v1057 = vpop.f32.mrb[0].mxu0
        %v1058 = vadd.f32 0.0, %v1057
        %v1059 = vpop.f32.mrb[0].mxu0
        %v1060 = vadd.f32 0.0, %v1059
        %1061 = vmatprep.mubr.f32.mxu0 0.0
        %1062 = vmatmul.mubr.f32.gmra.mrb[0].mxu0 %v867
        %v1063 = vpop.f32.mrb[0].mxu0
        %v1064 = vadd.f32 0.0, %v1063
        %v1065 = vpop.f32.mrb[0].mxu0
        %v1066 = vadd.f32 0.0, %v1065
        %1067 = vmatprep.mubr.f32.mxu0 0.0
        %1068 = vmatmul.mubr.f32.gmra.mrb[0].mxu0 %v871
        %v1069 = vpop.f32.mrb[0].mxu0
        %v1070 = vadd.f32 0.0, %v1069
        %v1071 = vpop.f32.mrb[0].mxu0
        %v1072 = vadd.f32 0.0, %v1071
        %1073 = vmatprep.mubr.f32.mxu0 0.0
        %1074 = vmatmul.mubr.f32.gmra.mrb[0].mxu0 %v875
        %v1075 = vpop.f32.mrb[0].mxu0
        %v1076 = vadd.f32 0.0, %v1075
        %v1077 = vpop.f32.mrb[0].mxu0
        %v1078 = vadd.f32 0.0, %v1077
        %1079 = vmatprep.mubr.f32.mxu0 0.0
        %1080 = vmatmul.mubr.f32.gmra.mrb[0].mxu0 %v879
        %v1081 = vpop.f32.mrb[0].mxu0
        %v1082 = vadd.f32 0.0, %v1081
        %v1083 = vpop.f32.mrb[0].mxu0
        %v1084 = vadd.f32 0.0, %v1083
        %1085 = vmatprep.mubr.f32.mxu0 0.0
        %1086 = vmatmul.mubr.f32.gmra.mrb[0].mxu0 %v883
        %v1087 = vpop.f32.mrb[0].mxu0
        %v1088 = vadd.f32 0.0, %v1087
        %v1089 = vpop.f32.mrb[0].mxu0
        %v1090 = vadd.f32 0.0, %v1089
        %1091 = vmatprep.mubr.f32.mxu0 0.0
        %1092 = vmatmul.mubr.f32.gmra.mrb[0].mxu0 %v887
        %v1093 = vpop.f32.mrb[0].mxu0
        %v1094 = vadd.f32 0.0, %v1093
        %v1095 = vpop.f32.mrb[0].mxu0
        %v1096 = vadd.f32 0.0, %v1095
        %1097 = vmatprep.mubr.f32.mxu0 0.0
        %1098 = vmatmul.mubr.f32.gmra.mrb[0].mxu0 %v891
        %v1099 = vpop.f32.mrb[0].mxu0
        %v1100 = vadd.f32 0.0, %v1099
        %v1101 = vpop.f32.mrb[0].mxu0
        %v1102 = vadd.f32 0.0, %v1101
        %1103 = vmatprep.mubr.f32.mxu0 0.0
        %1104 = vmatmul.mubr.f32.gmra.mrb[0].mxu0 %v895
        %v1105 = vpop.f32.mrb[0].mxu0
        %v1106 = vadd.f32 0.0, %v1105
        %v1107 = vpop.f32.mrb[0].mxu0
        %v1108 = vadd.f32 0.0, %v1107
        %1109 = vmatprep.mubr.f32.mxu0 0.0
        %1110 = vmatmul.mubr.f32.gmra.mrb[0].mxu0 %v899
        %v1111 = vpop.f32.mrb[0].mxu0
        %v1112 = vadd.f32 0.0, %v1111
        %v1113 = vpop.f32.mrb[0].mxu0
        %v1114 = vadd.f32 0.0, %v1113
        %1115 = vmatprep.mubr.f32.mxu0 0.0
        %1116 = vmatmul.mubr.f32.gmra.mrb[0].mxu0 %v903
        %v1117 = vpop.f32.mrb[0].mxu0
        %v1118 = vadd.f32 0.0, %v1117
        %v1119 = vpop.f32.mrb[0].mxu0
        %v1120 = vadd.f32 0.0, %v1119
        %1121 = vmatprep.mubr.f32.mxu0 0.0
        %1122 = vmatmul.mubr.f32.gmra.mrb[0].mxu0 %v907
        %v1123 = vpop.f32.mrb[0].mxu0
        %v1124 = vadd.f32 0.0, %v1123
        %v1125 = vpop.f32.mrb[0].mxu0
        %v1126 = vadd.f32 0.0, %v1125
        %1127 = vmatprep.mubr.f32.mxu0 0.0
        %1128 = vmatmul.mubr.f32.gmra.mrb[0].mxu0 %v911
        %v1129 = vpop.f32.mrb[0].mxu0
        %v1130 = vadd.f32 0.0, %v1129
        %v1131 = vpop.f32.mrb[0].mxu0
        %v1132 = vadd.f32 0.0, %v1131
        %1133 = vmatprep.mubr.f32.mxu0 0.0
        %1134 = vmatmul.mubr.f32.gmra.mrb[0].mxu0 %v915
        %v1135 = vpop.f32.mrb[0].mxu0
        %v1136 = vadd.f32 0.0, %v1135
        %v1137 = vpop.f32.mrb[0].mxu0
        %v1138 = vadd.f32 0.0, %v1137
        %1139 = vmatprep.mubr.f32.mxu0 0.0
        %1140 = vmatmul.mubr.f32.gmra.mrb[0].mxu0 %v919
        %v1141 = vpop.f32.mrb[0].mxu0
        %v1142 = vadd.f32 0.0, %v1141
        %v1143 = vpop.f32.mrb[0].mxu0
        %v1144 = vadd.f32 0.0, %v1143
        %1145 = vmatprep.mubr.f32.mxu0 0.0
        %1146 = vmatmul.mubr.f32.gmra.mrb[0].mxu0 %v923
        %v1147 = vpop.f32.mrb[0].mxu0
        %v1148 = vadd.f32 0.0, %v1147
        %v1149 = vpop.f32.mrb[0].mxu0
        %v1150 = vadd.f32 0.0, %v1149
        %1151 = vmatprep.mubr.f32.mxu0 0.0
        %1152 = vmatmul.mubr.f32.gmra.mrb[0].mxu0 %v927
        %v1153 = vpop.f32.mrb[0].mxu0
        %v1154 = vadd.f32 0.0, %v1153
        %v1155 = vpop.f32.mrb[0].mxu0
        %v1156 = vadd.f32 0.0, %v1155
        %1157 = vmatprep.mubr.f32.mxu0 0.0
        %1158 = vmatmul.mubr.f32.gmra.mrb[0].mxu0 %v931
        %v1159 = vpop.f32.mrb[0].mxu0
        %v1160 = vadd.f32 0.0, %v1159
        %v1161 = vpop.f32.mrb[0].mxu0
        %v1162 = vadd.f32 0.0, %v1161
        %1163 = vmatprep.mubr.f32.mxu0 0.0
        %1164 = vmatmul.mubr.f32.gmra.mrb[0].mxu0 %v935
        %v1165 = vpop.f32.mrb[0].mxu0
        %v1166 = vadd.f32 0.0, %v1165
        %v1167 = vpop.f32.mrb[0].mxu0
        %v1168 = vadd.f32 0.0, %v1167
        %1169 = vmatprep.mubr.f32.mxu0 0.0
        %1170 = vmatmul.mubr.f32.gmra.mrb[0].mxu0 %v939
        %v1171 = vpop.f32.mrb[0].mxu0
        %v1172 = vadd.f32 0.0, %v1171
        %v1173 = vpop.f32.mrb[0].mxu0
        %v1174 = vadd.f32 0.0, %v1173
        %1175 = vmatprep.mubr.f32.mxu0 0.0
        %1176 = vmatmul.mubr.f32.gmra.mrb[0].mxu0 %v943
        %v1177 = vpop.f32.mrb[0].mxu0
        %v1178 = vadd.f32 0.0, %v1177
        %v1179 = vpop.f32.mrb[0].mxu0
        %v1180 = vadd.f32 0.0, %v1179
        %1181 = vmatprep.mubr.f32.mxu0 0.0
        %1182 = vmatmul.mubr.f32.gmra.mrb[0].mxu0 %v947
        %v1183 = vpop.f32.mrb[0].mxu0
        %v1184 = vadd.f32 0.0, %v1183
        %v1185 = vpop.f32.mrb[0].mxu0
        %v1186 = vadd.f32 0.0, %v1185
        %1187 = vmatprep.mubr.f32.mxu0 0.0
        %1188 = vmatmul.mubr.f32.gmra.mrb[0].mxu0 %v951
        %v1189 = vpop.f32.mrb[0].mxu0
        %v1190 = vadd.f32 0.0, %v1189
        %v1191 = vpop.f32.mrb[0].mxu0
        %v1192 = vadd.f32 0.0, %v1191
        %1193 = vmatprep.mubr.f32.mxu0 0.0
        %1194 = vmatmul.mubr.f32.gmra.mrb[0].mxu0 %v955
        %v1195 = vpop.f32.mrb[0].mxu0
        %v1196 = vadd.f32 0.0, %v1195
        %v1197 = vpop.f32.mrb[0].mxu0
        %v1198 = vadd.f32 0.0, %v1197
        %1199 = vmatprep.mubr.f32.mxu0 0.0
        %1200 = vmatmul.mubr.f32.gmra.mrb[0].mxu0 %v959
        %v1201 = vpop.f32.mrb[0].mxu0
        %v1202 = vadd.f32 0.0, %v1201
        %v1203 = vpop.f32.mrb[0].mxu0
        %v1204 = vadd.f32 0.0, %v1203
        %1205 = vmatprep.mubr.f32.mxu0 0.0
        %1206 = vmatmul.mubr.f32.gmra.mrb[0].mxu0 %v963
        %v1207 = vpop.f32.mrb[0].mxu0
        %v1208 = vadd.f32 0.0, %v1207
        %v1209 = vpop.f32.mrb[0].mxu0
        %v1210 = vadd.f32 0.0, %v1209
        %1211 = vmatprep.mubr.f32.mxu0 0.0
        %1212 = vmatmul.mubr.f32.gmra.mrb[0].mxu0 %v967
        %v1213 = vpop.f32.mrb[0].mxu0
        %v1214 = vadd.f32 0.0, %v1213
        %v1215 = vpop.f32.mrb[0].mxu0
        %v1216 = vadd.f32 0.0, %v1215
        %1217 = vmatprep.mubr.f32.mxu0 0.0
        %1218 = vmatmul.mubr.f32.gmra.mrb[0].mxu0 %v971
        %v1219 = vpop.f32.mrb[0].mxu0
        %v1220 = vadd.f32 0.0, %v1219
        %v1221 = vpop.f32.mrb[0].mxu0
        %v1222 = vadd.f32 0.0, %v1221
        %1223 = vmatprep.mubr.f32.mxu0 0.0
        %1224 = vmatmul.mubr.f32.gmra.mrb[0].mxu0 %v975
        %v1225 = vpop.f32.mrb[0].mxu0
        %v1226 = vadd.f32 0.0, %v1225
        %v1227 = vpop.f32.mrb[0].mxu0
        %v1228 = vadd.f32 0.0, %v1227
        %1229 = vmatprep.mubr.f32.mxu0 0.0
        %1230 = vmatmul.mubr.f32.gmra.mrb[0].mxu0 %v979
        %v1231 = vpop.f32.mrb[0].mxu0
        %v1232 = vadd.f32 0.0, %v1231
        %v1233 = vpop.f32.mrb[0].mxu0
        %v1234 = vadd.f32 0.0, %v1233
        %1235 = vmatprep.mubr.f32.mxu0 0.0
        %1236 = vmatmul.mubr.f32.gmra.mrb[0].mxu0 %v983
        %v1237 = vpop.f32.mrb[0].mxu0
        %v1238 = vadd.f32 0.0, %v1237
        %v1239 = vpop.f32.mrb[0].mxu0
        %v1240 = vadd.f32 0.0, %v1239
        %1241 = vmatprep.mubr.f32.mxu0 0.0
        %1242 = vmatmul.mubr.f32.gmra.mrb[0].mxu0 %v987
        %v1243 = vpop.f32.mrb[0].mxu0
        %v1244 = vadd.f32 0.0, %v1243
        %v1245 = vpop.f32.mrb[0].mxu0
        %v1246 = vadd.f32 0.0, %v1245
        %1247 = vdwg.mxu0
        %1248 = vst [vmem:[%s229] sm:$0xff] %v1058
        %1249 = vst [vmem:[%s229 + $0x8] sm:$0xff] %v1060
        %1250 = vst [vmem:[%s229 + $0x40] sm:$0xff] %v1064
        %1251 = vst [vmem:[%s229 + $0x48] sm:$0xff] %v1066
        %1252 = vst [vmem:[%s229 + $0x80] sm:$0xff] %v1070
        %1253 = vst [vmem:[%s229 + $0x88] sm:$0xff] %v1072
        %1254 = vst [vmem:[%s229 + $0xc0] sm:$0xff] %v1076
        %1255 = vst [vmem:[%s229 + $0xc8] sm:$0xff] %v1078
        %1256 = vst [vmem:[%s229 + $0x100] sm:$0xff] %v1082
        %1257 = vst [vmem:[%s229 + $0x108] sm:$0xff] %v1084
        %1258 = vst [vmem:[%s229 + $0x140] sm:$0xff] %v1088
        %1259 = vst [vmem:[%s229 + $0x148] sm:$0xff] %v1090
        %1260 = vst [vmem:[%s229 + $0x180] sm:$0xff] %v1094
        %1261 = vst [vmem:[%s229 + $0x188] sm:$0xff] %v1096
        %1262 = vst [vmem:[%s229 + $0x1c0] sm:$0xff] %v1100
        %1263 = vst [vmem:[%s229 + $0x1c8] sm:$0xff] %v1102
        %1264 = vst [vmem:[%s229 + $0x200] sm:$0xff] %v1106
        %1265 = vst [vmem:[%s229 + $0x208] sm:$0xff] %v1108
        %1266 = vst [vmem:[%s229 + $0x240] sm:$0xff] %v1112
        %1267 = vst [vmem:[%s229 + $0x248] sm:$0xff] %v1114
        %1268 = vst [vmem:[%s229 + $0x280] sm:$0xff] %v1118
        %1269 = vst [vmem:[%s229 + $0x288] sm:$0xff] %v1120
        %1270 = vst [vmem:[%s229 + $0x2c0] sm:$0xff] %v1124
        %1271 = vst [vmem:[%s229 + $0x2c8] sm:$0xff] %v1126
        %1272 = vst [vmem:[%s229 + $0x300] sm:$0xff] %v1130
        %1273 = vst [vmem:[%s229 + $0x308] sm:$0xff] %v1132
        %1274 = vst [vmem:[%s229 + $0x340] sm:$0xff] %v1136
        %1275 = vst [vmem:[%s229 + $0x348] sm:$0xff] %v1138
        %1276 = vst [vmem:[%s229 + $0x380] sm:$0xff] %v1142
        %1277 = vst [vmem:[%s229 + $0x388] sm:$0xff] %v1144
        %1278 = vst [vmem:[%s229 + $0x3c0] sm:$0xff] %v1148
        %1279 = vst [vmem:[%s229 + $0x3c8] sm:$0xff] %v1150
        %1280 = vst [vmem:[%s229 + $0x400] sm:$0xff] %v1154
        %1281 = vst [vmem:[%s229 + $0x408] sm:$0xff] %v1156
        %1282 = vst [vmem:[%s229 + $0x440] sm:$0xff] %v1160
        %1283 = vst [vmem:[%s229 + $0x448] sm:$0xff] %v1162
        %1284 = vst [vmem:[%s229 + $0x480] sm:$0xff] %v1166
        %1285 = vst [vmem:[%s229 + $0x488] sm:$0xff] %v1168
        %1286 = vst [vmem:[%s229 + $0x4c0] sm:$0xff] %v1172
        %1287 = vst [vmem:[%s229 + $0x4c8] sm:$0xff] %v1174
        %1288 = vst [vmem:[%s229 + $0x500] sm:$0xff] %v1178
        %1289 = vst [vmem:[%s229 + $0x508] sm:$0xff] %v1180
        %1290 = vst [vmem:[%s229 + $0x540] sm:$0xff] %v1184
        %1291 = vst [vmem:[%s229 + $0x548] sm:$0xff] %v1186
        %1292 = vst [vmem:[%s229 + $0x580] sm:$0xff] %v1190
        %1293 = vst [vmem:[%s229 + $0x588] sm:$0xff] %v1192
        %1294 = vst [vmem:[%s229 + $0x5c0] sm:$0xff] %v1196
        %1295 = vst [vmem:[%s229 + $0x5c8] sm:$0xff] %v1198
        %1296 = vst [vmem:[%s229 + $0x600] sm:$0xff] %v1202
        %1297 = vst [vmem:[%s229 + $0x608] sm:$0xff] %v1204
        %1298 = vst [vmem:[%s229 + $0x640] sm:$0xff] %v1208
        %1299 = vst [vmem:[%s229 + $0x648] sm:$0xff] %v1210
        %1300 = vst [vmem:[%s229 + $0x680] sm:$0xff] %v1214
        %1301 = vst [vmem:[%s229 + $0x688] sm:$0xff] %v1216
        %1302 = vst [vmem:[%s229 + $0x6c0] sm:$0xff] %v1220
        %1303 = vst [vmem:[%s229 + $0x6c8] sm:$0xff] %v1222
        %1304 = vst [vmem:[%s229 + $0x700] sm:$0xff] %v1226
        %1305 = vst [vmem:[%s229 + $0x708] sm:$0xff] %v1228
        %1306 = vst [vmem:[%s229 + $0x740] sm:$0xff] %v1232
        %1307 = vst [vmem:[%s229 + $0x748] sm:$0xff] %v1234
        %1308 = vst [vmem:[%s229 + $0x780] sm:$0xff] %v1238
        %1309 = vst [vmem:[%s229 + $0x788] sm:$0xff] %v1240
        %1310 = vst [vmem:[%s229 + $0x7c0] sm:$0xff] %v1244
        %1311 = vst [vmem:[%s229 + $0x7c8] sm:$0xff] %v1246
        %1312 = vmatprep.subr.mxu0 0.0
        %1313 = vmatpush1.xpose.msra.mxu0 %v231
        %1314 = vmatprep.subr.mxu0 0.0
        %1315 = vmatpush1.xpose.msra.mxu0 %v232
        %1316 = vmatprep.subr.mxu0 0.0
        %1317 = vmatpush1.xpose.msra.mxu0 %v233
        %1318 = vmatprep.subr.mxu0 0.0
        %1319 = vmatpush1.xpose.msra.mxu0 %v234
        %1320 = vmatprep.subr.mxu0 0.0
        %1321 = vmatpush1.xpose.msra.mxu0 %v235
        %1322 = vmatprep.subr.mxu0 0.0
        %1323 = vmatpush1.xpose.msra.mxu0 %v236
        %1324 = vmatprep.subr.mxu0 0.0
        %1325 = vmatpush1.xpose.msra.mxu0 %v237
        %1326 = vmatprep.subr.mxu0 0.0
        %1327 = vmatpush1.xpose.msra.mxu0 %v238
        %1328 = vmatprep.subr.mxu0 0.0
        %1329 = vmatpush1.xpose.msra.mxu0 %v239
        %1330 = vmatprep.subr.mxu0 0.0
        %1331 = vmatpush1.xpose.msra.mxu0 %v240
        %1332 = vmatprep.subr.mxu0 0.0
        %1333 = vmatpush1.xpose.msra.mxu0 %v241
        %1334 = vmatprep.subr.mxu0 0.0
        %1335 = vmatpush1.xpose.msra.mxu0 %v242
        %1336 = vmatprep.subr.mxu0 0.0
        %1337 = vmatpush1.xpose.msra.mxu0 %v243
        %1338 = vmatprep.subr.mxu0 0.0
        %1339 = vmatpush1.xpose.msra.mxu0 %v244
        %1340 = vmatprep.subr.mxu0 0.0
        %1341 = vmatpush1.xpose.msra.mxu0 %v245
        %1342 = vmatprep.subr.mxu0 0.0
        %1343 = vmatpush1.xpose.msra.mxu0 %v246
        %1344 = vmatprep.subr.mxu0 0.0
        %1345 = vmatpush1.xpose.msra.mxu0 %v247
        %1346 = vmatprep.subr.mxu0 0.0
        %1347 = vmatpush1.xpose.msra.mxu0 %v248
        %1348 = vmatprep.subr.mxu0 0.0
        %1349 = vmatpush1.xpose.msra.mxu0 %v249
        %1350 = vmatprep.subr.mxu0 0.0
        %1351 = vmatpush1.xpose.msra.mxu0 %v250
        %1352 = vmatprep.subr.mxu0 0.0
        %1353 = vmatpush1.xpose.msra.mxu0 %v251
        %1354 = vmatprep.subr.mxu0 0.0
        %1355 = vmatpush1.xpose.msra.mxu0 %v252
        %1356 = vmatprep.subr.mxu0 0.0
        %1357 = vmatpush1.xpose.msra.mxu0 %v253
        %1358 = vmatprep.subr.mxu0 0.0
        %1359 = vmatpush1.xpose.msra.mxu0 %v254
        %1360 = vmatprep.subr.mxu0 0.0
        %1361 = vmatpush1.xpose.msra.mxu0 %v255
        %1362 = vmatprep.subr.mxu0 0.0
        %1363 = vmatpush1.xpose.msra.mxu0 %v256
        %1364 = vmatprep.subr.mxu0 0.0
        %1365 = vmatpush1.xpose.msra.mxu0 %v257
        %1366 = vmatprep.subr.mxu0 0.0
        %1367 = vmatpush1.xpose.msra.mxu0 %v258
        %1368 = vmatprep.subr.mxu0 0.0
        %1369 = vmatpush1.xpose.msra.mxu0 %v259
        %1370 = vmatprep.subr.mxu0 0.0
        %1371 = vmatpush1.xpose.msra.mxu0 %v260
        %1372 = vmatprep.subr.mxu0 0.0
        %1373 = vmatpush1.xpose.msra.mxu0 %v261
        %1374 = vmatprep.subr.mxu0 0.0
        %1375 = vmatpush1.xpose.msra.mxu0 %v262
        %1376 = vmatprep.mubr.f32.mxu0 0.0
        %1377 = vmatmul.mubr.f32.gmra.mrb[0].mxu0 %v864
        %v1378 = vpop.f32.mrb[0].mxu0
        %v1379 = vadd.f32 0.0, %v1378
        %v1380 = vpop.f32.mrb[0].mxu0
        %v1381 = vadd.f32 0.0, %v1380
        %1382 = vmatprep.mubr.f32.mxu0 0.0
        %1383 = vmatmul.mubr.f32.gmra.mrb[0].mxu0 %v868
        %v1384 = vpop.f32.mrb[0].mxu0
        %v1385 = vadd.f32 0.0, %v1384
        %v1386 = vpop.f32.mrb[0].mxu0
        %v1387 = vadd.f32 0.0, %v1386
        %1388 = vmatprep.mubr.f32.mxu0 0.0
        %1389 = vmatmul.mubr.f32.gmra.mrb[0].mxu0 %v872
        %v1390 = vpop.f32.mrb[0].mxu0
        %v1391 = vadd.f32 0.0, %v1390
        %v1392 = vpop.f32.mrb[0].mxu0
        %v1393 = vadd.f32 0.0, %v1392
        %1394 = vmatprep.mubr.f32.mxu0 0.0
        %1395 = vmatmul.mubr.f32.gmra.mrb[0].mxu0 %v876
        %v1396 = vpop.f32.mrb[0].mxu0
        %v1397 = vadd.f32 0.0, %v1396
        %v1398 = vpop.f32.mrb[0].mxu0
        %v1399 = vadd.f32 0.0, %v1398
        %1400 = vmatprep.mubr.f32.mxu0 0.0
        %1401 = vmatmul.mubr.f32.gmra.mrb[0].mxu0 %v880
        %v1402 = vpop.f32.mrb[0].mxu0
        %v1403 = vadd.f32 0.0, %v1402
        %v1404 = vpop.f32.mrb[0].mxu0
        %v1405 = vadd.f32 0.0, %v1404
        %1406 = vmatprep.mubr.f32.mxu0 0.0
        %1407 = vmatmul.mubr.f32.gmra.mrb[0].mxu0 %v884
        %v1408 = vpop.f32.mrb[0].mxu0
        %v1409 = vadd.f32 0.0, %v1408
        %v1410 = vpop.f32.mrb[0].mxu0
        %v1411 = vadd.f32 0.0, %v1410
        %1412 = vmatprep.mubr.f32.mxu0 0.0
        %1413 = vmatmul.mubr.f32.gmra.mrb[0].mxu0 %v888
        %v1414 = vpop.f32.mrb[0].mxu0
        %v1415 = vadd.f32 0.0, %v1414
        %v1416 = vpop.f32.mrb[0].mxu0
        %v1417 = vadd.f32 0.0, %v1416
        %1418 = vmatprep.mubr.f32.mxu0 0.0
        %1419 = vmatmul.mubr.f32.gmra.mrb[0].mxu0 %v892
        %v1420 = vpop.f32.mrb[0].mxu0
        %v1421 = vadd.f32 0.0, %v1420
        %v1422 = vpop.f32.mrb[0].mxu0
        %v1423 = vadd.f32 0.0, %v1422
        %1424 = vmatprep.mubr.f32.mxu0 0.0
        %1425 = vmatmul.mubr.f32.gmra.mrb[0].mxu0 %v896
        %v1426 = vpop.f32.mrb[0].mxu0
        %v1427 = vadd.f32 0.0, %v1426
        %v1428 = vpop.f32.mrb[0].mxu0
        %v1429 = vadd.f32 0.0, %v1428
        %1430 = vmatprep.mubr.f32.mxu0 0.0
        %1431 = vmatmul.mubr.f32.gmra.mrb[0].mxu0 %v900
        %v1432 = vpop.f32.mrb[0].mxu0
        %v1433 = vadd.f32 0.0, %v1432
        %v1434 = vpop.f32.mrb[0].mxu0
        %v1435 = vadd.f32 0.0, %v1434
        %1436 = vmatprep.mubr.f32.mxu0 0.0
        %1437 = vmatmul.mubr.f32.gmra.mrb[0].mxu0 %v904
        %v1438 = vpop.f32.mrb[0].mxu0
        %v1439 = vadd.f32 0.0, %v1438
        %v1440 = vpop.f32.mrb[0].mxu0
        %v1441 = vadd.f32 0.0, %v1440
        %1442 = vmatprep.mubr.f32.mxu0 0.0
        %1443 = vmatmul.mubr.f32.gmra.mrb[0].mxu0 %v908
        %v1444 = vpop.f32.mrb[0].mxu0
        %v1445 = vadd.f32 0.0, %v1444
        %v1446 = vpop.f32.mrb[0].mxu0
        %v1447 = vadd.f32 0.0, %v1446
        %1448 = vmatprep.mubr.f32.mxu0 0.0
        %1449 = vmatmul.mubr.f32.gmra.mrb[0].mxu0 %v912
        %v1450 = vpop.f32.mrb[0].mxu0
        %v1451 = vadd.f32 0.0, %v1450
        %v1452 = vpop.f32.mrb[0].mxu0
        %v1453 = vadd.f32 0.0, %v1452
        %1454 = vmatprep.mubr.f32.mxu0 0.0
        %1455 = vmatmul.mubr.f32.gmra.mrb[0].mxu0 %v916
        %v1456 = vpop.f32.mrb[0].mxu0
        %v1457 = vadd.f32 0.0, %v1456
        %v1458 = vpop.f32.mrb[0].mxu0
        %v1459 = vadd.f32 0.0, %v1458
        %1460 = vmatprep.mubr.f32.mxu0 0.0
        %1461 = vmatmul.mubr.f32.gmra.mrb[0].mxu0 %v920
        %v1462 = vpop.f32.mrb[0].mxu0
        %v1463 = vadd.f32 0.0, %v1462
        %v1464 = vpop.f32.mrb[0].mxu0
        %v1465 = vadd.f32 0.0, %v1464
        %1466 = vmatprep.mubr.f32.mxu0 0.0
        %1467 = vmatmul.mubr.f32.gmra.mrb[0].mxu0 %v924
        %v1468 = vpop.f32.mrb[0].mxu0
        %v1469 = vadd.f32 0.0, %v1468
        %v1470 = vpop.f32.mrb[0].mxu0
        %v1471 = vadd.f32 0.0, %v1470
        %1472 = vmatprep.mubr.f32.mxu0 0.0
        %1473 = vmatmul.mubr.f32.gmra.mrb[0].mxu0 %v928
        %v1474 = vpop.f32.mrb[0].mxu0
        %v1475 = vadd.f32 0.0, %v1474
        %v1476 = vpop.f32.mrb[0].mxu0
        %v1477 = vadd.f32 0.0, %v1476
        %1478 = vmatprep.mubr.f32.mxu0 0.0
        %1479 = vmatmul.mubr.f32.gmra.mrb[0].mxu0 %v932
        %v1480 = vpop.f32.mrb[0].mxu0
        %v1481 = vadd.f32 0.0, %v1480
        %v1482 = vpop.f32.mrb[0].mxu0
        %v1483 = vadd.f32 0.0, %v1482
        %1484 = vmatprep.mubr.f32.mxu0 0.0
        %1485 = vmatmul.mubr.f32.gmra.mrb[0].mxu0 %v936
        %v1486 = vpop.f32.mrb[0].mxu0
        %v1487 = vadd.f32 0.0, %v1486
        %v1488 = vpop.f32.mrb[0].mxu0
        %v1489 = vadd.f32 0.0, %v1488
        %1490 = vmatprep.mubr.f32.mxu0 0.0
        %1491 = vmatmul.mubr.f32.gmra.mrb[0].mxu0 %v940
        %v1492 = vpop.f32.mrb[0].mxu0
        %v1493 = vadd.f32 0.0, %v1492
        %v1494 = vpop.f32.mrb[0].mxu0
        %v1495 = vadd.f32 0.0, %v1494
        %1496 = vmatprep.mubr.f32.mxu0 0.0
        %1497 = vmatmul.mubr.f32.gmra.mrb[0].mxu0 %v944
        %v1498 = vpop.f32.mrb[0].mxu0
        %v1499 = vadd.f32 0.0, %v1498
        %v1500 = vpop.f32.mrb[0].mxu0
        %v1501 = vadd.f32 0.0, %v1500
        %1502 = vmatprep.mubr.f32.mxu0 0.0
        %1503 = vmatmul.mubr.f32.gmra.mrb[0].mxu0 %v948
        %v1504 = vpop.f32.mrb[0].mxu0
        %v1505 = vadd.f32 0.0, %v1504
        %v1506 = vpop.f32.mrb[0].mxu0
        %v1507 = vadd.f32 0.0, %v1506
        %1508 = vmatprep.mubr.f32.mxu0 0.0
        %1509 = vmatmul.mubr.f32.gmra.mrb[0].mxu0 %v952
        %v1510 = vpop.f32.mrb[0].mxu0
        %v1511 = vadd.f32 0.0, %v1510
        %v1512 = vpop.f32.mrb[0].mxu0
        %v1513 = vadd.f32 0.0, %v1512
        %1514 = vmatprep.mubr.f32.mxu0 0.0
        %1515 = vmatmul.mubr.f32.gmra.mrb[0].mxu0 %v956
        %v1516 = vpop.f32.mrb[0].mxu0
        %v1517 = vadd.f32 0.0, %v1516
        %v1518 = vpop.f32.mrb[0].mxu0
        %v1519 = vadd.f32 0.0, %v1518
        %1520 = vmatprep.mubr.f32.mxu0 0.0
        %1521 = vmatmul.mubr.f32.gmra.mrb[0].mxu0 %v960
        %v1522 = vpop.f32.mrb[0].mxu0
        %v1523 = vadd.f32 0.0, %v1522
        %v1524 = vpop.f32.mrb[0].mxu0
        %v1525 = vadd.f32 0.0, %v1524
        %1526 = vmatprep.mubr.f32.mxu0 0.0
        %1527 = vmatmul.mubr.f32.gmra.mrb[0].mxu0 %v964
        %v1528 = vpop.f32.mrb[0].mxu0
        %v1529 = vadd.f32 0.0, %v1528
        %v1530 = vpop.f32.mrb[0].mxu0
        %v1531 = vadd.f32 0.0, %v1530
        %1532 = vmatprep.mubr.f32.mxu0 0.0
        %1533 = vmatmul.mubr.f32.gmra.mrb[0].mxu0 %v968
        %v1534 = vpop.f32.mrb[0].mxu0
        %v1535 = vadd.f32 0.0, %v1534
        %v1536 = vpop.f32.mrb[0].mxu0
        %v1537 = vadd.f32 0.0, %v1536
        %1538 = vmatprep.mubr.f32.mxu0 0.0
        %1539 = vmatmul.mubr.f32.gmra.mrb[0].mxu0 %v972
        %v1540 = vpop.f32.mrb[0].mxu0
        %v1541 = vadd.f32 0.0, %v1540
        %v1542 = vpop.f32.mrb[0].mxu0
        %v1543 = vadd.f32 0.0, %v1542
        %1544 = vmatprep.mubr.f32.mxu0 0.0
        %1545 = vmatmul.mubr.f32.gmra.mrb[0].mxu0 %v976
        %v1546 = vpop.f32.mrb[0].mxu0
        %v1547 = vadd.f32 0.0, %v1546
        %v1548 = vpop.f32.mrb[0].mxu0
        %v1549 = vadd.f32 0.0, %v1548
        %1550 = vmatprep.mubr.f32.mxu0 0.0
        %1551 = vmatmul.mubr.f32.gmra.mrb[0].mxu0 %v980
        %v1552 = vpop.f32.mrb[0].mxu0
        %v1553 = vadd.f32 0.0, %v1552
        %v1554 = vpop.f32.mrb[0].mxu0
        %v1555 = vadd.f32 0.0, %v1554
        %1556 = vmatprep.mubr.f32.mxu0 0.0
        %1557 = vmatmul.mubr.f32.gmra.mrb[0].mxu0 %v984
        %v1558 = vpop.f32.mrb[0].mxu0
        %v1559 = vadd.f32 0.0, %v1558
        %v1560 = vpop.f32.mrb[0].mxu0
        %v1561 = vadd.f32 0.0, %v1560
        %1562 = vmatprep.mubr.f32.mxu0 0.0
        %1563 = vmatmul.mubr.f32.gmra.mrb[0].mxu0 %v988
        %v1564 = vpop.f32.mrb[0].mxu0
        %v1565 = vadd.f32 0.0, %v1564
        %v1566 = vpop.f32.mrb[0].mxu0
        %v1567 = vadd.f32 0.0, %v1566
        %1568 = vdwg.mxu0
        %1569 = vst [vmem:[%s229 + $0x10] sm:$0xff] %v1379
        %1570 = vst [vmem:[%s229 + $0x18] sm:$0xff] %v1381
        %1571 = vst [vmem:[%s229 + $0x50] sm:$0xff] %v1385
        %1572 = vst [vmem:[%s229 + $0x58] sm:$0xff] %v1387
        %1573 = vst [vmem:[%s229 + $0x90] sm:$0xff] %v1391
        %1574 = vst [vmem:[%s229 + $0x98] sm:$0xff] %v1393
        %1575 = vst [vmem:[%s229 + $0xd0] sm:$0xff] %v1397
        %1576 = vst [vmem:[%s229 + $0xd8] sm:$0xff] %v1399
        %1577 = vst [vmem:[%s229 + $0x110] sm:$0xff] %v1403
        %1578 = vst [vmem:[%s229 + $0x118] sm:$0xff] %v1405
        %1579 = vst [vmem:[%s229 + $0x150] sm:$0xff] %v1409
        %1580 = vst [vmem:[%s229 + $0x158] sm:$0xff] %v1411
        %1581 = vst [vmem:[%s229 + $0x190] sm:$0xff] %v1415
        %1582 = vst [vmem:[%s229 + $0x198] sm:$0xff] %v1417
        %1583 = vst [vmem:[%s229 + $0x1d0] sm:$0xff] %v1421
        %1584 = vst [vmem:[%s229 + $0x1d8] sm:$0xff] %v1423
        %1585 = vst [vmem:[%s229 + $0x210] sm:$0xff] %v1427
        %1586 = vst [vmem:[%s229 + $0x218] sm:$0xff] %v1429
        %1587 = vst [vmem:[%s229 + $0x250] sm:$0xff] %v1433
        %1588 = vst [vmem:[%s229 + $0x258] sm:$0xff] %v1435
        %1589 = vst [vmem:[%s229 + $0x290] sm:$0xff] %v1439
        %1590 = vst [vmem:[%s229 + $0x298] sm:$0xff] %v1441
        %1591 = vst [vmem:[%s229 + $0x2d0] sm:$0xff] %v1445
        %1592 = vst [vmem:[%s229 + $0x2d8] sm:$0xff] %v1447
        %1593 = vst [vmem:[%s229 + $0x310] sm:$0xff] %v1451
        %1594 = vst [vmem:[%s229 + $0x318] sm:$0xff] %v1453
        %1595 = vst [vmem:[%s229 + $0x350] sm:$0xff] %v1457
        %1596 = vst [vmem:[%s229 + $0x358] sm:$0xff] %v1459
        %1597 = vst [vmem:[%s229 + $0x390] sm:$0xff] %v1463
        %1598 = vst [vmem:[%s229 + $0x398] sm:$0xff] %v1465
        %1599 = vst [vmem:[%s229 + $0x3d0] sm:$0xff] %v1469
        %1600 = vst [vmem:[%s229 + $0x3d8] sm:$0xff] %v1471
        %1601 = vst [vmem:[%s229 + $0x410] sm:$0xff] %v1475
        %1602 = vst [vmem:[%s229 + $0x418] sm:$0xff] %v1477
        %1603 = vst [vmem:[%s229 + $0x450] sm:$0xff] %v1481
        %1604 = vst [vmem:[%s229 + $0x458] sm:$0xff] %v1483
        %1605 = vst [vmem:[%s229 + $0x490] sm:$0xff] %v1487
        %1606 = vst [vmem:[%s229 + $0x498] sm:$0xff] %v1489
        %1607 = vst [vmem:[%s229 + $0x4d0] sm:$0xff] %v1493
        %1608 = vst [vmem:[%s229 + $0x4d8] sm:$0xff] %v1495
        %1609 = vst [vmem:[%s229 + $0x510] sm:$0xff] %v1499
        %1610 = vst [vmem:[%s229 + $0x518] sm:$0xff] %v1501
        %1611 = vst [vmem:[%s229 + $0x550] sm:$0xff] %v1505
        %1612 = vst [vmem:[%s229 + $0x558] sm:$0xff] %v1507
        %1613 = vst [vmem:[%s229 + $0x590] sm:$0xff] %v1511
        %1614 = vst [vmem:[%s229 + $0x598] sm:$0xff] %v1513
        %1615 = vst [vmem:[%s229 + $0x5d0] sm:$0xff] %v1517
        %1616 = vst [vmem:[%s229 + $0x5d8] sm:$0xff] %v1519
        %1617 = vst [vmem:[%s229 + $0x610] sm:$0xff] %v1523
        %1618 = vst [vmem:[%s229 + $0x618] sm:$0xff] %v1525
        %1619 = vst [vmem:[%s229 + $0x650] sm:$0xff] %v1529
        %1620 = vst [vmem:[%s229 + $0x658] sm:$0xff] %v1531
        %1621 = vst [vmem:[%s229 + $0x690] sm:$0xff] %v1535
        %1622 = vst [vmem:[%s229 + $0x698] sm:$0xff] %v1537
        %1623 = vst [vmem:[%s229 + $0x6d0] sm:$0xff] %v1541
        %1624 = vst [vmem:[%s229 + $0x6d8] sm:$0xff] %v1543
        %1625 = vst [vmem:[%s229 + $0x710] sm:$0xff] %v1547
        %1626 = vst [vmem:[%s229 + $0x718] sm:$0xff] %v1549
        %1627 = vst [vmem:[%s229 + $0x750] sm:$0xff] %v1553
        %1628 = vst [vmem:[%s229 + $0x758] sm:$0xff] %v1555
        %1629 = vst [vmem:[%s229 + $0x790] sm:$0xff] %v1559
        %1630 = vst [vmem:[%s229 + $0x798] sm:$0xff] %v1561
        %1631 = vst [vmem:[%s229 + $0x7d0] sm:$0xff] %v1565
        %1632 = vst [vmem:[%s229 + $0x7d8] sm:$0xff] %v1567
        %1633 = vmatprep.subr.mxu0 0.0
        %1634 = vmatpush1.xpose.msra.mxu0 %v231
        %1635 = vmatprep.subr.mxu0 0.0
        %1636 = vmatpush1.xpose.msra.mxu0 %v232
        %1637 = vmatprep.subr.mxu0 0.0
        %1638 = vmatpush1.xpose.msra.mxu0 %v233
        %1639 = vmatprep.subr.mxu0 0.0
        %1640 = vmatpush1.xpose.msra.mxu0 %v234
        %1641 = vmatprep.subr.mxu0 0.0
        %1642 = vmatpush1.xpose.msra.mxu0 %v235
        %1643 = vmatprep.subr.mxu0 0.0
        %1644 = vmatpush1.xpose.msra.mxu0 %v236
        %1645 = vmatprep.subr.mxu0 0.0
        %1646 = vmatpush1.xpose.msra.mxu0 %v237
        %1647 = vmatprep.subr.mxu0 0.0
        %1648 = vmatpush1.xpose.msra.mxu0 %v238
        %1649 = vmatprep.subr.mxu0 0.0
        %1650 = vmatpush1.xpose.msra.mxu0 %v239
        %1651 = vmatprep.subr.mxu0 0.0
        %1652 = vmatpush1.xpose.msra.mxu0 %v240
        %1653 = vmatprep.subr.mxu0 0.0
        %1654 = vmatpush1.xpose.msra.mxu0 %v241
        %1655 = vmatprep.subr.mxu0 0.0
        %1656 = vmatpush1.xpose.msra.mxu0 %v242
        %1657 = vmatprep.subr.mxu0 0.0
        %1658 = vmatpush1.xpose.msra.mxu0 %v243
        %1659 = vmatprep.subr.mxu0 0.0
        %1660 = vmatpush1.xpose.msra.mxu0 %v244
        %1661 = vmatprep.subr.mxu0 0.0
        %1662 = vmatpush1.xpose.msra.mxu0 %v245
        %1663 = vmatprep.subr.mxu0 0.0
        %1664 = vmatpush1.xpose.msra.mxu0 %v246
        %1665 = vmatprep.subr.mxu0 0.0
        %1666 = vmatpush1.xpose.msra.mxu0 %v247
        %1667 = vmatprep.subr.mxu0 0.0
        %1668 = vmatpush1.xpose.msra.mxu0 %v248
        %1669 = vmatprep.subr.mxu0 0.0
        %1670 = vmatpush1.xpose.msra.mxu0 %v249
        %1671 = vmatprep.subr.mxu0 0.0
        %1672 = vmatpush1.xpose.msra.mxu0 %v250
        %1673 = vmatprep.subr.mxu0 0.0
        %1674 = vmatpush1.xpose.msra.mxu0 %v251
        %1675 = vmatprep.subr.mxu0 0.0
        %1676 = vmatpush1.xpose.msra.mxu0 %v252
        %1677 = vmatprep.subr.mxu0 0.0
        %1678 = vmatpush1.xpose.msra.mxu0 %v253
        %1679 = vmatprep.subr.mxu0 0.0
        %1680 = vmatpush1.xpose.msra.mxu0 %v254
        %1681 = vmatprep.subr.mxu0 0.0
        %1682 = vmatpush1.xpose.msra.mxu0 %v255
        %1683 = vmatprep.subr.mxu0 0.0
        %1684 = vmatpush1.xpose.msra.mxu0 %v256
        %1685 = vmatprep.subr.mxu0 0.0
        %1686 = vmatpush1.xpose.msra.mxu0 %v257
        %1687 = vmatprep.subr.mxu0 0.0
        %1688 = vmatpush1.xpose.msra.mxu0 %v258
        %1689 = vmatprep.subr.mxu0 0.0
        %1690 = vmatpush1.xpose.msra.mxu0 %v259
        %1691 = vmatprep.subr.mxu0 0.0
        %1692 = vmatpush1.xpose.msra.mxu0 %v260
        %1693 = vmatprep.subr.mxu0 0.0
        %1694 = vmatpush1.xpose.msra.mxu0 %v261
        %1695 = vmatprep.subr.mxu0 0.0
        %1696 = vmatpush1.xpose.msra.mxu0 %v262
        %1697 = vmatprep.mubr.f32.mxu0 0.0
        %1698 = vmatmul.mubr.f32.gmra.mrb[0].mxu0 %v865
        %v1699 = vpop.f32.mrb[0].mxu0
        %v1700 = vadd.f32 0.0, %v1699
        %v1701 = vpop.f32.mrb[0].mxu0
        %v1702 = vadd.f32 0.0, %v1701
        %1703 = vmatprep.mubr.f32.mxu0 0.0
        %1704 = vmatmul.mubr.f32.gmra.mrb[0].mxu0 %v869
        %v1705 = vpop.f32.mrb[0].mxu0
        %v1706 = vadd.f32 0.0, %v1705
        %v1707 = vpop.f32.mrb[0].mxu0
        %v1708 = vadd.f32 0.0, %v1707
        %1709 = vmatprep.mubr.f32.mxu0 0.0
        %1710 = vmatmul.mubr.f32.gmra.mrb[0].mxu0 %v873
        %v1711 = vpop.f32.mrb[0].mxu0
        %v1712 = vadd.f32 0.0, %v1711
        %v1713 = vpop.f32.mrb[0].mxu0
        %v1714 = vadd.f32 0.0, %v1713
        %1715 = vmatprep.mubr.f32.mxu0 0.0
        %1716 = vmatmul.mubr.f32.gmra.mrb[0].mxu0 %v877
        %v1717 = vpop.f32.mrb[0].mxu0
        %v1718 = vadd.f32 0.0, %v1717
        %v1719 = vpop.f32.mrb[0].mxu0
        %v1720 = vadd.f32 0.0, %v1719
        %1721 = vmatprep.mubr.f32.mxu0 0.0
        %1722 = vmatmul.mubr.f32.gmra.mrb[0].mxu0 %v881
        %v1723 = vpop.f32.mrb[0].mxu0
        %v1724 = vadd.f32 0.0, %v1723
        %v1725 = vpop.f32.mrb[0].mxu0
        %v1726 = vadd.f32 0.0, %v1725
        %1727 = vmatprep.mubr.f32.mxu0 0.0
        %1728 = vmatmul.mubr.f32.gmra.mrb[0].mxu0 %v885
        %v1729 = vpop.f32.mrb[0].mxu0
        %v1730 = vadd.f32 0.0, %v1729
        %v1731 = vpop.f32.mrb[0].mxu0
        %v1732 = vadd.f32 0.0, %v1731
        %1733 = vmatprep.mubr.f32.mxu0 0.0
        %1734 = vmatmul.mubr.f32.gmra.mrb[0].mxu0 %v889
        %v1735 = vpop.f32.mrb[0].mxu0
        %v1736 = vadd.f32 0.0, %v1735
        %v1737 = vpop.f32.mrb[0].mxu0
        %v1738 = vadd.f32 0.0, %v1737
        %1739 = vmatprep.mubr.f32.mxu0 0.0
        %1740 = vmatmul.mubr.f32.gmra.mrb[0].mxu0 %v893
        %v1741 = vpop.f32.mrb[0].mxu0
        %v1742 = vadd.f32 0.0, %v1741
        %v1743 = vpop.f32.mrb[0].mxu0
        %v1744 = vadd.f32 0.0, %v1743
        %1745 = vmatprep.mubr.f32.mxu0 0.0
        %1746 = vmatmul.mubr.f32.gmra.mrb[0].mxu0 %v897
        %v1747 = vpop.f32.mrb[0].mxu0
        %v1748 = vadd.f32 0.0, %v1747
        %v1749 = vpop.f32.mrb[0].mxu0
        %v1750 = vadd.f32 0.0, %v1749
        %1751 = vmatprep.mubr.f32.mxu0 0.0
        %1752 = vmatmul.mubr.f32.gmra.mrb[0].mxu0 %v901
        %v1753 = vpop.f32.mrb[0].mxu0
        %v1754 = vadd.f32 0.0, %v1753
        %v1755 = vpop.f32.mrb[0].mxu0
        %v1756 = vadd.f32 0.0, %v1755
        %1757 = vmatprep.mubr.f32.mxu0 0.0
        %1758 = vmatmul.mubr.f32.gmra.mrb[0].mxu0 %v905
        %v1759 = vpop.f32.mrb[0].mxu0
        %v1760 = vadd.f32 0.0, %v1759
        %v1761 = vpop.f32.mrb[0].mxu0
        %v1762 = vadd.f32 0.0, %v1761
        %1763 = vmatprep.mubr.f32.mxu0 0.0
        %1764 = vmatmul.mubr.f32.gmra.mrb[0].mxu0 %v909
        %v1765 = vpop.f32.mrb[0].mxu0
        %v1766 = vadd.f32 0.0, %v1765
        %v1767 = vpop.f32.mrb[0].mxu0
        %v1768 = vadd.f32 0.0, %v1767
        %1769 = vmatprep.mubr.f32.mxu0 0.0
        %1770 = vmatmul.mubr.f32.gmra.mrb[0].mxu0 %v913
        %v1771 = vpop.f32.mrb[0].mxu0
        %v1772 = vadd.f32 0.0, %v1771
        %v1773 = vpop.f32.mrb[0].mxu0
        %v1774 = vadd.f32 0.0, %v1773
        %1775 = vmatprep.mubr.f32.mxu0 0.0
        %1776 = vmatmul.mubr.f32.gmra.mrb[0].mxu0 %v917
        %v1777 = vpop.f32.mrb[0].mxu0
        %v1778 = vadd.f32 0.0, %v1777
        %v1779 = vpop.f32.mrb[0].mxu0
        %v1780 = vadd.f32 0.0, %v1779
        %1781 = vmatprep.mubr.f32.mxu0 0.0
        %1782 = vmatmul.mubr.f32.gmra.mrb[0].mxu0 %v921
        %v1783 = vpop.f32.mrb[0].mxu0
        %v1784 = vadd.f32 0.0, %v1783
        %v1785 = vpop.f32.mrb[0].mxu0
        %v1786 = vadd.f32 0.0, %v1785
        %1787 = vmatprep.mubr.f32.mxu0 0.0
        %1788 = vmatmul.mubr.f32.gmra.mrb[0].mxu0 %v925
        %v1789 = vpop.f32.mrb[0].mxu0
        %v1790 = vadd.f32 0.0, %v1789
        %v1791 = vpop.f32.mrb[0].mxu0
        %v1792 = vadd.f32 0.0, %v1791
        %1793 = vmatprep.mubr.f32.mxu0 0.0
        %1794 = vmatmul.mubr.f32.gmra.mrb[0].mxu0 %v929
        %v1795 = vpop.f32.mrb[0].mxu0
        %v1796 = vadd.f32 0.0, %v1795
        %v1797 = vpop.f32.mrb[0].mxu0
        %v1798 = vadd.f32 0.0, %v1797
        %1799 = vmatprep.mubr.f32.mxu0 0.0
        %1800 = vmatmul.mubr.f32.gmra.mrb[0].mxu0 %v933
        %v1801 = vpop.f32.mrb[0].mxu0
        %v1802 = vadd.f32 0.0, %v1801
        %v1803 = vpop.f32.mrb[0].mxu0
        %v1804 = vadd.f32 0.0, %v1803
        %1805 = vmatprep.mubr.f32.mxu0 0.0
        %1806 = vmatmul.mubr.f32.gmra.mrb[0].mxu0 %v937
        %v1807 = vpop.f32.mrb[0].mxu0
        %v1808 = vadd.f32 0.0, %v1807
        %v1809 = vpop.f32.mrb[0].mxu0
        %v1810 = vadd.f32 0.0, %v1809
        %1811 = vmatprep.mubr.f32.mxu0 0.0
        %1812 = vmatmul.mubr.f32.gmra.mrb[0].mxu0 %v941
        %v1813 = vpop.f32.mrb[0].mxu0
        %v1814 = vadd.f32 0.0, %v1813
        %v1815 = vpop.f32.mrb[0].mxu0
        %v1816 = vadd.f32 0.0, %v1815
        %1817 = vmatprep.mubr.f32.mxu0 0.0
        %1818 = vmatmul.mubr.f32.gmra.mrb[0].mxu0 %v945
        %v1819 = vpop.f32.mrb[0].mxu0
        %v1820 = vadd.f32 0.0, %v1819
        %v1821 = vpop.f32.mrb[0].mxu0
        %v1822 = vadd.f32 0.0, %v1821
        %1823 = vmatprep.mubr.f32.mxu0 0.0
        %1824 = vmatmul.mubr.f32.gmra.mrb[0].mxu0 %v949
        %v1825 = vpop.f32.mrb[0].mxu0
        %v1826 = vadd.f32 0.0, %v1825
        %v1827 = vpop.f32.mrb[0].mxu0
        %v1828 = vadd.f32 0.0, %v1827
        %1829 = vmatprep.mubr.f32.mxu0 0.0
        %1830 = vmatmul.mubr.f32.gmra.mrb[0].mxu0 %v953
        %v1831 = vpop.f32.mrb[0].mxu0
        %v1832 = vadd.f32 0.0, %v1831
        %v1833 = vpop.f32.mrb[0].mxu0
        %v1834 = vadd.f32 0.0, %v1833
        %1835 = vmatprep.mubr.f32.mxu0 0.0
        %1836 = vmatmul.mubr.f32.gmra.mrb[0].mxu0 %v957
        %v1837 = vpop.f32.mrb[0].mxu0
        %v1838 = vadd.f32 0.0, %v1837
        %v1839 = vpop.f32.mrb[0].mxu0
        %v1840 = vadd.f32 0.0, %v1839
        %1841 = vmatprep.mubr.f32.mxu0 0.0
        %1842 = vmatmul.mubr.f32.gmra.mrb[0].mxu0 %v961
        %v1843 = vpop.f32.mrb[0].mxu0
        %v1844 = vadd.f32 0.0, %v1843
        %v1845 = vpop.f32.mrb[0].mxu0
        %v1846 = vadd.f32 0.0, %v1845
        %1847 = vmatprep.mubr.f32.mxu0 0.0
        %1848 = vmatmul.mubr.f32.gmra.mrb[0].mxu0 %v965
        %v1849 = vpop.f32.mrb[0].mxu0
        %v1850 = vadd.f32 0.0, %v1849
        %v1851 = vpop.f32.mrb[0].mxu0
        %v1852 = vadd.f32 0.0, %v1851
        %1853 = vmatprep.mubr.f32.mxu0 0.0
        %1854 = vmatmul.mubr.f32.gmra.mrb[0].mxu0 %v969
        %v1855 = vpop.f32.mrb[0].mxu0
        %v1856 = vadd.f32 0.0, %v1855
        %v1857 = vpop.f32.mrb[0].mxu0
        %v1858 = vadd.f32 0.0, %v1857
        %1859 = vmatprep.mubr.f32.mxu0 0.0
        %1860 = vmatmul.mubr.f32.gmra.mrb[0].mxu0 %v973
        %v1861 = vpop.f32.mrb[0].mxu0
        %v1862 = vadd.f32 0.0, %v1861
        %v1863 = vpop.f32.mrb[0].mxu0
        %v1864 = vadd.f32 0.0, %v1863
        %1865 = vmatprep.mubr.f32.mxu0 0.0
        %1866 = vmatmul.mubr.f32.gmra.mrb[0].mxu0 %v977
        %v1867 = vpop.f32.mrb[0].mxu0
        %v1868 = vadd.f32 0.0, %v1867
        %v1869 = vpop.f32.mrb[0].mxu0
        %v1870 = vadd.f32 0.0, %v1869
        %1871 = vmatprep.mubr.f32.mxu0 0.0
        %1872 = vmatmul.mubr.f32.gmra.mrb[0].mxu0 %v981
        %v1873 = vpop.f32.mrb[0].mxu0
        %v1874 = vadd.f32 0.0, %v1873
        %v1875 = vpop.f32.mrb[0].mxu0
        %v1876 = vadd.f32 0.0, %v1875
        %1877 = vmatprep.mubr.f32.mxu0 0.0
        %1878 = vmatmul.mubr.f32.gmra.mrb[0].mxu0 %v985
        %v1879 = vpop.f32.mrb[0].mxu0
        %v1880 = vadd.f32 0.0, %v1879
        %v1881 = vpop.f32.mrb[0].mxu0
        %v1882 = vadd.f32 0.0, %v1881
        %1883 = vmatprep.mubr.f32.mxu0 0.0
        %1884 = vmatmul.mubr.f32.gmra.mrb[0].mxu0 %v989
        %v1885 = vpop.f32.mrb[0].mxu0
        %v1886 = vadd.f32 0.0, %v1885
        %v1887 = vpop.f32.mrb[0].mxu0
        %v1888 = vadd.f32 0.0, %v1887
        %1889 = vdwg.mxu0
        %1890 = vst [vmem:[%s229 + $0x20] sm:$0xff] %v1700
        %1891 = vst [vmem:[%s229 + $0x28] sm:$0xff] %v1702
        %1892 = vst [vmem:[%s229 + $0x60] sm:$0xff] %v1706
        %1893 = vst [vmem:[%s229 + $0x68] sm:$0xff] %v1708
        %1894 = vst [vmem:[%s229 + $0xa0] sm:$0xff] %v1712
        %1895 = vst [vmem:[%s229 + $0xa8] sm:$0xff] %v1714
        %1896 = vst [vmem:[%s229 + $0xe0] sm:$0xff] %v1718
        %1897 = vst [vmem:[%s229 + $0xe8] sm:$0xff] %v1720
        %1898 = vst [vmem:[%s229 + $0x120] sm:$0xff] %v1724
        %1899 = vst [vmem:[%s229 + $0x128] sm:$0xff] %v1726
        %1900 = vst [vmem:[%s229 + $0x160] sm:$0xff] %v1730
        %1901 = vst [vmem:[%s229 + $0x168] sm:$0xff] %v1732
        %1902 = vst [vmem:[%s229 + $0x1a0] sm:$0xff] %v1736
        %1903 = vst [vmem:[%s229 + $0x1a8] sm:$0xff] %v1738
        %1904 = vst [vmem:[%s229 + $0x1e0] sm:$0xff] %v1742
        %1905 = vst [vmem:[%s229 + $0x1e8] sm:$0xff] %v1744
        %1906 = vst [vmem:[%s229 + $0x220] sm:$0xff] %v1748
        %1907 = vst [vmem:[%s229 + $0x228] sm:$0xff] %v1750
        %1908 = vst [vmem:[%s229 + $0x260] sm:$0xff] %v1754
        %1909 = vst [vmem:[%s229 + $0x268] sm:$0xff] %v1756
        %1910 = vst [vmem:[%s229 + $0x2a0] sm:$0xff] %v1760
        %1911 = vst [vmem:[%s229 + $0x2a8] sm:$0xff] %v1762
        %1912 = vst [vmem:[%s229 + $0x2e0] sm:$0xff] %v1766
        %1913 = vst [vmem:[%s229 + $0x2e8] sm:$0xff] %v1768
        %1914 = vst [vmem:[%s229 + $0x320] sm:$0xff] %v1772
        %1915 = vst [vmem:[%s229 + $0x328] sm:$0xff] %v1774
        %1916 = vst [vmem:[%s229 + $0x360] sm:$0xff] %v1778
        %1917 = vst [vmem:[%s229 + $0x368] sm:$0xff] %v1780
        %1918 = vst [vmem:[%s229 + $0x3a0] sm:$0xff] %v1784
        %1919 = vst [vmem:[%s229 + $0x3a8] sm:$0xff] %v1786
        %1920 = vst [vmem:[%s229 + $0x3e0] sm:$0xff] %v1790
        %1921 = vst [vmem:[%s229 + $0x3e8] sm:$0xff] %v1792
        %1922 = vst [vmem:[%s229 + $0x420] sm:$0xff] %v1796
        %1923 = vst [vmem:[%s229 + $0x428] sm:$0xff] %v1798
        %1924 = vst [vmem:[%s229 + $0x460] sm:$0xff] %v1802
        %1925 = vst [vmem:[%s229 + $0x468] sm:$0xff] %v1804
        %1926 = vst [vmem:[%s229 + $0x4a0] sm:$0xff] %v1808
        %1927 = vst [vmem:[%s229 + $0x4a8] sm:$0xff] %v1810
        %1928 = vst [vmem:[%s229 + $0x4e0] sm:$0xff] %v1814
        %1929 = vst [vmem:[%s229 + $0x4e8] sm:$0xff] %v1816
        %1930 = vst [vmem:[%s229 + $0x520] sm:$0xff] %v1820
        %1931 = vst [vmem:[%s229 + $0x528] sm:$0xff] %v1822
        %1932 = vst [vmem:[%s229 + $0x560] sm:$0xff] %v1826
        %1933 = vst [vmem:[%s229 + $0x568] sm:$0xff] %v1828
        %1934 = vst [vmem:[%s229 + $0x5a0] sm:$0xff] %v1832
        %1935 = vst [vmem:[%s229 + $0x5a8] sm:$0xff] %v1834
        %1936 = vst [vmem:[%s229 + $0x5e0] sm:$0xff] %v1838
        %1937 = vst [vmem:[%s229 + $0x5e8] sm:$0xff] %v1840
        %1938 = vst [vmem:[%s229 + $0x620] sm:$0xff] %v1844
        %1939 = vst [vmem:[%s229 + $0x628] sm:$0xff] %v1846
        %1940 = vst [vmem:[%s229 + $0x660] sm:$0xff] %v1850
        %1941 = vst [vmem:[%s229 + $0x668] sm:$0xff] %v1852
        %1942 = vst [vmem:[%s229 + $0x6a0] sm:$0xff] %v1856
        %1943 = vst [vmem:[%s229 + $0x6a8] sm:$0xff] %v1858
        %1944 = vst [vmem:[%s229 + $0x6e0] sm:$0xff] %v1862
        %1945 = vst [vmem:[%s229 + $0x6e8] sm:$0xff] %v1864
        %1946 = vst [vmem:[%s229 + $0x720] sm:$0xff] %v1868
        %1947 = vst [vmem:[%s229 + $0x728] sm:$0xff] %v1870
        %1948 = vst [vmem:[%s229 + $0x760] sm:$0xff] %v1874
        %1949 = vst [vmem:[%s229 + $0x768] sm:$0xff] %v1876
        %1950 = vst [vmem:[%s229 + $0x7a0] sm:$0xff] %v1880
        %1951 = vst [vmem:[%s229 + $0x7a8] sm:$0xff] %v1882
        %1952 = vst [vmem:[%s229 + $0x7e0] sm:$0xff] %v1886
        %1953 = vst [vmem:[%s229 + $0x7e8] sm:$0xff] %v1888
        %1954 = vmatprep.subr.mxu0 0.0
        %1955 = vmatpush1.xpose.msra.mxu0 %v231
        %1956 = vmatprep.subr.mxu0 0.0
        %1957 = vmatpush1.xpose.msra.mxu0 %v232
        %1958 = vmatprep.subr.mxu0 0.0
        %1959 = vmatpush1.xpose.msra.mxu0 %v233
        %1960 = vmatprep.subr.mxu0 0.0
        %1961 = vmatpush1.xpose.msra.mxu0 %v234
        %1962 = vmatprep.subr.mxu0 0.0
        %1963 = vmatpush1.xpose.msra.mxu0 %v235
        %1964 = vmatprep.subr.mxu0 0.0
        %1965 = vmatpush1.xpose.msra.mxu0 %v236
        %1966 = vmatprep.subr.mxu0 0.0
        %1967 = vmatpush1.xpose.msra.mxu0 %v237
        %1968 = vmatprep.subr.mxu0 0.0
        %1969 = vmatpush1.xpose.msra.mxu0 %v238
        %1970 = vmatprep.subr.mxu0 0.0
        %1971 = vmatpush1.xpose.msra.mxu0 %v239
        %1972 = vmatprep.subr.mxu0 0.0
        %1973 = vmatpush1.xpose.msra.mxu0 %v240
        %1974 = vmatprep.subr.mxu0 0.0
        %1975 = vmatpush1.xpose.msra.mxu0 %v241
        %1976 = vmatprep.subr.mxu0 0.0
        %1977 = vmatpush1.xpose.msra.mxu0 %v242
        %1978 = vmatprep.subr.mxu0 0.0
        %1979 = vmatpush1.xpose.msra.mxu0 %v243
        %1980 = vmatprep.subr.mxu0 0.0
        %1981 = vmatpush1.xpose.msra.mxu0 %v244
        %1982 = vmatprep.subr.mxu0 0.0
        %1983 = vmatpush1.xpose.msra.mxu0 %v245
        %1984 = vmatprep.subr.mxu0 0.0
        %1985 = vmatpush1.xpose.msra.mxu0 %v246
        %1986 = vmatprep.subr.mxu0 0.0
        %1987 = vmatpush1.xpose.msra.mxu0 %v247
        %1988 = vmatprep.subr.mxu0 0.0
        %1989 = vmatpush1.xpose.msra.mxu0 %v248
        %1990 = vmatprep.subr.mxu0 0.0
        %1991 = vmatpush1.xpose.msra.mxu0 %v249
        %1992 = vmatprep.subr.mxu0 0.0
        %1993 = vmatpush1.xpose.msra.mxu0 %v250
        %1994 = vmatprep.subr.mxu0 0.0
        %1995 = vmatpush1.xpose.msra.mxu0 %v251
        %1996 = vmatprep.subr.mxu0 0.0
        %1997 = vmatpush1.xpose.msra.mxu0 %v252
        %1998 = vmatprep.subr.mxu0 0.0
        %1999 = vmatpush1.xpose.msra.mxu0 %v253
        %2000 = vmatprep.subr.mxu0 0.0
        %2001 = vmatpush1.xpose.msra.mxu0 %v254
        %2002 = vmatprep.subr.mxu0 0.0
        %2003 = vmatpush1.xpose.msra.mxu0 %v255
        %2004 = vmatprep.subr.mxu0 0.0
        %2005 = vmatpush1.xpose.msra.mxu0 %v256
        %2006 = vmatprep.subr.mxu0 0.0
        %2007 = vmatpush1.xpose.msra.mxu0 %v257
        %2008 = vmatprep.subr.mxu0 0.0
        %2009 = vmatpush1.xpose.msra.mxu0 %v258
        %2010 = vmatprep.subr.mxu0 0.0
        %2011 = vmatpush1.xpose.msra.mxu0 %v259
        %2012 = vmatprep.subr.mxu0 0.0
        %2013 = vmatpush1.xpose.msra.mxu0 %v260
        %2014 = vmatprep.subr.mxu0 0.0
        %2015 = vmatpush1.xpose.msra.mxu0 %v261
        %2016 = vmatprep.subr.mxu0 0.0
        %2017 = vmatpush1.xpose.msra.mxu0 %v262
        %2018 = vmatprep.mubr.f32.mxu0 0.0
        %2019 = vmatmul.mubr.f32.gmra.mrb[0].mxu0 %v866
        %v2020 = vpop.f32.mrb[0].mxu0
        %v2021 = vadd.f32 0.0, %v2020
        %v2022 = vpop.f32.mrb[0].mxu0
        %v2023 = vadd.f32 0.0, %v2022
        %2024 = vmatprep.mubr.f32.mxu0 0.0
        %2025 = vmatmul.mubr.f32.gmra.mrb[0].mxu0 %v870
        %v2026 = vpop.f32.mrb[0].mxu0
        %v2027 = vadd.f32 0.0, %v2026
        %v2028 = vpop.f32.mrb[0].mxu0
        %v2029 = vadd.f32 0.0, %v2028
        %2030 = vmatprep.mubr.f32.mxu0 0.0
        %2031 = vmatmul.mubr.f32.gmra.mrb[0].mxu0 %v874
        %v2032 = vpop.f32.mrb[0].mxu0
        %v2033 = vadd.f32 0.0, %v2032
        %v2034 = vpop.f32.mrb[0].mxu0
        %v2035 = vadd.f32 0.0, %v2034
        %2036 = vmatprep.mubr.f32.mxu0 0.0
        %2037 = vmatmul.mubr.f32.gmra.mrb[0].mxu0 %v878
        %v2038 = vpop.f32.mrb[0].mxu0
        %v2039 = vadd.f32 0.0, %v2038
        %v2040 = vpop.f32.mrb[0].mxu0
        %v2041 = vadd.f32 0.0, %v2040
        %2042 = vmatprep.mubr.f32.mxu0 0.0
        %2043 = vmatmul.mubr.f32.gmra.mrb[0].mxu0 %v882
        %v2044 = vpop.f32.mrb[0].mxu0
        %v2045 = vadd.f32 0.0, %v2044
        %v2046 = vpop.f32.mrb[0].mxu0
        %v2047 = vadd.f32 0.0, %v2046
        %2048 = vmatprep.mubr.f32.mxu0 0.0
        %2049 = vmatmul.mubr.f32.gmra.mrb[0].mxu0 %v886
        %v2050 = vpop.f32.mrb[0].mxu0
        %v2051 = vadd.f32 0.0, %v2050
        %v2052 = vpop.f32.mrb[0].mxu0
        %v2053 = vadd.f32 0.0, %v2052
        %2054 = vmatprep.mubr.f32.mxu0 0.0
        %2055 = vmatmul.mubr.f32.gmra.mrb[0].mxu0 %v890
        %v2056 = vpop.f32.mrb[0].mxu0
        %v2057 = vadd.f32 0.0, %v2056
        %v2058 = vpop.f32.mrb[0].mxu0
        %v2059 = vadd.f32 0.0, %v2058
        %2060 = vmatprep.mubr.f32.mxu0 0.0
        %2061 = vmatmul.mubr.f32.gmra.mrb[0].mxu0 %v894
        %v2062 = vpop.f32.mrb[0].mxu0
        %v2063 = vadd.f32 0.0, %v2062
        %v2064 = vpop.f32.mrb[0].mxu0
        %v2065 = vadd.f32 0.0, %v2064
        %2066 = vmatprep.mubr.f32.mxu0 0.0
        %2067 = vmatmul.mubr.f32.gmra.mrb[0].mxu0 %v898
        %v2068 = vpop.f32.mrb[0].mxu0
        %v2069 = vadd.f32 0.0, %v2068
        %v2070 = vpop.f32.mrb[0].mxu0
        %v2071 = vadd.f32 0.0, %v2070
        %2072 = vmatprep.mubr.f32.mxu0 0.0
        %2073 = vmatmul.mubr.f32.gmra.mrb[0].mxu0 %v902
        %v2074 = vpop.f32.mrb[0].mxu0
        %v2075 = vadd.f32 0.0, %v2074
        %v2076 = vpop.f32.mrb[0].mxu0
        %v2077 = vadd.f32 0.0, %v2076
        %2078 = vmatprep.mubr.f32.mxu0 0.0
        %2079 = vmatmul.mubr.f32.gmra.mrb[0].mxu0 %v906
        %v2080 = vpop.f32.mrb[0].mxu0
        %v2081 = vadd.f32 0.0, %v2080
        %v2082 = vpop.f32.mrb[0].mxu0
        %v2083 = vadd.f32 0.0, %v2082
        %2084 = vmatprep.mubr.f32.mxu0 0.0
        %2085 = vmatmul.mubr.f32.gmra.mrb[0].mxu0 %v910
        %v2086 = vpop.f32.mrb[0].mxu0
        %v2087 = vadd.f32 0.0, %v2086
        %v2088 = vpop.f32.mrb[0].mxu0
        %v2089 = vadd.f32 0.0, %v2088
        %2090 = vmatprep.mubr.f32.mxu0 0.0
        %2091 = vmatmul.mubr.f32.gmra.mrb[0].mxu0 %v914
        %v2092 = vpop.f32.mrb[0].mxu0
        %v2093 = vadd.f32 0.0, %v2092
        %v2094 = vpop.f32.mrb[0].mxu0
        %v2095 = vadd.f32 0.0, %v2094
        %2096 = vmatprep.mubr.f32.mxu0 0.0
        %2097 = vmatmul.mubr.f32.gmra.mrb[0].mxu0 %v918
        %v2098 = vpop.f32.mrb[0].mxu0
        %v2099 = vadd.f32 0.0, %v2098
        %v2100 = vpop.f32.mrb[0].mxu0
        %v2101 = vadd.f32 0.0, %v2100
        %2102 = vmatprep.mubr.f32.mxu0 0.0
        %2103 = vmatmul.mubr.f32.gmra.mrb[0].mxu0 %v922
        %v2104 = vpop.f32.mrb[0].mxu0
        %v2105 = vadd.f32 0.0, %v2104
        %v2106 = vpop.f32.mrb[0].mxu0
        %v2107 = vadd.f32 0.0, %v2106
        %2108 = vmatprep.mubr.f32.mxu0 0.0
        %2109 = vmatmul.mubr.f32.gmra.mrb[0].mxu0 %v926
        %v2110 = vpop.f32.mrb[0].mxu0
        %v2111 = vadd.f32 0.0, %v2110
        %v2112 = vpop.f32.mrb[0].mxu0
        %v2113 = vadd.f32 0.0, %v2112
        %2114 = vmatprep.mubr.f32.mxu0 0.0
        %2115 = vmatmul.mubr.f32.gmra.mrb[0].mxu0 %v930
        %v2116 = vpop.f32.mrb[0].mxu0
        %v2117 = vadd.f32 0.0, %v2116
        %v2118 = vpop.f32.mrb[0].mxu0
        %v2119 = vadd.f32 0.0, %v2118
        %2120 = vmatprep.mubr.f32.mxu0 0.0
        %2121 = vmatmul.mubr.f32.gmra.mrb[0].mxu0 %v934
        %v2122 = vpop.f32.mrb[0].mxu0
        %v2123 = vadd.f32 0.0, %v2122
        %v2124 = vpop.f32.mrb[0].mxu0
        %v2125 = vadd.f32 0.0, %v2124
        %2126 = vmatprep.mubr.f32.mxu0 0.0
        %2127 = vmatmul.mubr.f32.gmra.mrb[0].mxu0 %v938
        %v2128 = vpop.f32.mrb[0].mxu0
        %v2129 = vadd.f32 0.0, %v2128
        %v2130 = vpop.f32.mrb[0].mxu0
        %v2131 = vadd.f32 0.0, %v2130
        %2132 = vmatprep.mubr.f32.mxu0 0.0
        %2133 = vmatmul.mubr.f32.gmra.mrb[0].mxu0 %v942
        %v2134 = vpop.f32.mrb[0].mxu0
        %v2135 = vadd.f32 0.0, %v2134
        %v2136 = vpop.f32.mrb[0].mxu0
        %v2137 = vadd.f32 0.0, %v2136
        %2138 = vmatprep.mubr.f32.mxu0 0.0
        %2139 = vmatmul.mubr.f32.gmra.mrb[0].mxu0 %v946
        %v2140 = vpop.f32.mrb[0].mxu0
        %v2141 = vadd.f32 0.0, %v2140
        %v2142 = vpop.f32.mrb[0].mxu0
        %v2143 = vadd.f32 0.0, %v2142
        %2144 = vmatprep.mubr.f32.mxu0 0.0
        %2145 = vmatmul.mubr.f32.gmra.mrb[0].mxu0 %v950
        %v2146 = vpop.f32.mrb[0].mxu0
        %v2147 = vadd.f32 0.0, %v2146
        %v2148 = vpop.f32.mrb[0].mxu0
        %v2149 = vadd.f32 0.0, %v2148
        %2150 = vmatprep.mubr.f32.mxu0 0.0
        %2151 = vmatmul.mubr.f32.gmra.mrb[0].mxu0 %v954
        %v2152 = vpop.f32.mrb[0].mxu0
        %v2153 = vadd.f32 0.0, %v2152
        %v2154 = vpop.f32.mrb[0].mxu0
        %v2155 = vadd.f32 0.0, %v2154
        %2156 = vmatprep.mubr.f32.mxu0 0.0
        %2157 = vmatmul.mubr.f32.gmra.mrb[0].mxu0 %v958
        %v2158 = vpop.f32.mrb[0].mxu0
        %v2159 = vadd.f32 0.0, %v2158
        %v2160 = vpop.f32.mrb[0].mxu0
        %v2161 = vadd.f32 0.0, %v2160
        %2162 = vmatprep.mubr.f32.mxu0 0.0
        %2163 = vmatmul.mubr.f32.gmra.mrb[0].mxu0 %v962
        %v2164 = vpop.f32.mrb[0].mxu0
        %v2165 = vadd.f32 0.0, %v2164
        %v2166 = vpop.f32.mrb[0].mxu0
        %v2167 = vadd.f32 0.0, %v2166
        %2168 = vmatprep.mubr.f32.mxu0 0.0
        %2169 = vmatmul.mubr.f32.gmra.mrb[0].mxu0 %v966
        %v2170 = vpop.f32.mrb[0].mxu0
        %v2171 = vadd.f32 0.0, %v2170
        %v2172 = vpop.f32.mrb[0].mxu0
        %v2173 = vadd.f32 0.0, %v2172
        %2174 = vmatprep.mubr.f32.mxu0 0.0
        %2175 = vmatmul.mubr.f32.gmra.mrb[0].mxu0 %v970
        %v2176 = vpop.f32.mrb[0].mxu0
        %v2177 = vadd.f32 0.0, %v2176
        %v2178 = vpop.f32.mrb[0].mxu0
        %v2179 = vadd.f32 0.0, %v2178
        %2180 = vmatprep.mubr.f32.mxu0 0.0
        %2181 = vmatmul.mubr.f32.gmra.mrb[0].mxu0 %v974
        %v2182 = vpop.f32.mrb[0].mxu0
        %v2183 = vadd.f32 0.0, %v2182
        %v2184 = vpop.f32.mrb[0].mxu0
        %v2185 = vadd.f32 0.0, %v2184
        %2186 = vmatprep.mubr.f32.mxu0 0.0
        %2187 = vmatmul.mubr.f32.gmra.mrb[0].mxu0 %v978
        %v2188 = vpop.f32.mrb[0].mxu0
        %v2189 = vadd.f32 0.0, %v2188
        %v2190 = vpop.f32.mrb[0].mxu0
        %v2191 = vadd.f32 0.0, %v2190
        %2192 = vmatprep.mubr.f32.mxu0 0.0
        %2193 = vmatmul.mubr.f32.gmra.mrb[0].mxu0 %v982
        %v2194 = vpop.f32.mrb[0].mxu0
        %v2195 = vadd.f32 0.0, %v2194
        %v2196 = vpop.f32.mrb[0].mxu0
        %v2197 = vadd.f32 0.0, %v2196
        %2198 = vmatprep.mubr.f32.mxu0 0.0
        %2199 = vmatmul.mubr.f32.gmra.mrb[0].mxu0 %v986
        %v2200 = vpop.f32.mrb[0].mxu0
        %v2201 = vadd.f32 0.0, %v2200
        %v2202 = vpop.f32.mrb[0].mxu0
        %v2203 = vadd.f32 0.0, %v2202
        %2204 = vmatprep.mubr.f32.mxu0 0.0
        %2205 = vmatmul.mubr.f32.gmra.mrb[0].mxu0 %v990
        %v2206 = vpop.f32.mrb[0].mxu0
        %v2207 = vadd.f32 0.0, %v2206
        %v2208 = vpop.f32.mrb[0].mxu0
        %v2209 = vadd.f32 0.0, %v2208
        %2210 = vdwg.mxu0
        %2211 = vst [vmem:[%s229 + $0x30] sm:$0xff] %v2021
        %2212 = vst [vmem:[%s229 + $0x38] sm:$0xff] %v2023
        %2213 = vst [vmem:[%s229 + $0x70] sm:$0xff] %v2027
        %2214 = vst [vmem:[%s229 + $0x78] sm:$0xff] %v2029
        %2215 = vst [vmem:[%s229 + $0xb0] sm:$0xff] %v2033
        %2216 = vst [vmem:[%s229 + $0xb8] sm:$0xff] %v2035
        %2217 = vst [vmem:[%s229 + $0xf0] sm:$0xff] %v2039
        %2218 = vst [vmem:[%s229 + $0xf8] sm:$0xff] %v2041
        %2219 = vst [vmem:[%s229 + $0x130] sm:$0xff] %v2045
        %2220 = vst [vmem:[%s229 + $0x138] sm:$0xff] %v2047
        %2221 = vst [vmem:[%s229 + $0x170] sm:$0xff] %v2051
        %2222 = vst [vmem:[%s229 + $0x178] sm:$0xff] %v2053
        %2223 = vst [vmem:[%s229 + $0x1b0] sm:$0xff] %v2057
        %2224 = vst [vmem:[%s229 + $0x1b8] sm:$0xff] %v2059
        %2225 = vst [vmem:[%s229 + $0x1f0] sm:$0xff] %v2063
        %2226 = vst [vmem:[%s229 + $0x1f8] sm:$0xff] %v2065
        %2227 = vst [vmem:[%s229 + $0x230] sm:$0xff] %v2069
        %2228 = vst [vmem:[%s229 + $0x238] sm:$0xff] %v2071
        %2229 = vst [vmem:[%s229 + $0x270] sm:$0xff] %v2075
        %2230 = vst [vmem:[%s229 + $0x278] sm:$0xff] %v2077
        %2231 = vst [vmem:[%s229 + $0x2b0] sm:$0xff] %v2081
        %2232 = vst [vmem:[%s229 + $0x2b8] sm:$0xff] %v2083
        %2233 = vst [vmem:[%s229 + $0x2f0] sm:$0xff] %v2087
        %2234 = vst [vmem:[%s229 + $0x2f8] sm:$0xff] %v2089
        %2235 = vst [vmem:[%s229 + $0x330] sm:$0xff] %v2093
        %2236 = vst [vmem:[%s229 + $0x338] sm:$0xff] %v2095
        %2237 = vst [vmem:[%s229 + $0x370] sm:$0xff] %v2099
        %2238 = vst [vmem:[%s229 + $0x378] sm:$0xff] %v2101
        %2239 = vst [vmem:[%s229 + $0x3b0] sm:$0xff] %v2105
        %2240 = vst [vmem:[%s229 + $0x3b8] sm:$0xff] %v2107
        %2241 = vst [vmem:[%s229 + $0x3f0] sm:$0xff] %v2111
        %2242 = vst [vmem:[%s229 + $0x3f8] sm:$0xff] %v2113
        %2243 = vst [vmem:[%s229 + $0x430] sm:$0xff] %v2117
        %2244 = vst [vmem:[%s229 + $0x438] sm:$0xff] %v2119
        %2245 = vst [vmem:[%s229 + $0x470] sm:$0xff] %v2123
        %2246 = vst [vmem:[%s229 + $0x478] sm:$0xff] %v2125
        %2247 = vst [vmem:[%s229 + $0x4b0] sm:$0xff] %v2129
        %2248 = vst [vmem:[%s229 + $0x4b8] sm:$0xff] %v2131
        %2249 = vst [vmem:[%s229 + $0x4f0] sm:$0xff] %v2135
        %2250 = vst [vmem:[%s229 + $0x4f8] sm:$0xff] %v2137
        %2251 = vst [vmem:[%s229 + $0x530] sm:$0xff] %v2141
        %2252 = vst [vmem:[%s229 + $0x538] sm:$0xff] %v2143
        %2253 = vst [vmem:[%s229 + $0x570] sm:$0xff] %v2147
        %2254 = vst [vmem:[%s229 + $0x578] sm:$0xff] %v2149
        %2255 = vst [vmem:[%s229 + $0x5b0] sm:$0xff] %v2153
        %2256 = vst [vmem:[%s229 + $0x5b8] sm:$0xff] %v2155
        %2257 = vst [vmem:[%s229 + $0x5f0] sm:$0xff] %v2159
        %2258 = vst [vmem:[%s229 + $0x5f8] sm:$0xff] %v2161
        %2259 = vst [vmem:[%s229 + $0x630] sm:$0xff] %v2165
        %2260 = vst [vmem:[%s229 + $0x638] sm:$0xff] %v2167
        %2261 = vst [vmem:[%s229 + $0x670] sm:$0xff] %v2171
        %2262 = vst [vmem:[%s229 + $0x678] sm:$0xff] %v2173
        %2263 = vst [vmem:[%s229 + $0x6b0] sm:$0xff] %v2177
        %2264 = vst [vmem:[%s229 + $0x6b8] sm:$0xff] %v2179
        %2265 = vst [vmem:[%s229 + $0x6f0] sm:$0xff] %v2183
        %2266 = vst [vmem:[%s229 + $0x6f8] sm:$0xff] %v2185
        %2267 = vst [vmem:[%s229 + $0x730] sm:$0xff] %v2189
        %2268 = vst [vmem:[%s229 + $0x738] sm:$0xff] %v2191
        %2269 = vst [vmem:[%s229 + $0x770] sm:$0xff] %v2195
        %2270 = vst [vmem:[%s229 + $0x778] sm:$0xff] %v2197
        %2271 = vst [vmem:[%s229 + $0x7b0] sm:$0xff] %v2201
        %2272 = vst [vmem:[%s229 + $0x7b8] sm:$0xff] %v2203
        %2273 = vst [vmem:[%s229 + $0x7f0] sm:$0xff] %v2207
        %2274 = vst [vmem:[%s229 + $0x7f8] sm:$0xff] %v2209
        %s2275 = sand.u32 %s111, 1
        %s2276 = scalar_lea.sflag [#allocation4], %s2275
        %s2277 = sand.u32 %s111, 1
        %s2278 = smul.addr %s2277, 2048
        %s2279 = scalar_lea.vmem [#allocation8], %s2278
        // Predicated region
        $region45: #{tpu_custom_call.1} parent=31 // pred_check
          %p2280 = pneg %p121
        $region46: #{tpu_custom_call.1} parent=31 // pred_check_branch
          %2282 = sbr.rel (%p2280) target = $region48
        $region47: #{tpu_custom_call.1} parent=31 // pred_region
          %s2283 = smul.u32 32, %s26
          %s2285 = ssub.s32 32768, 32768
          %2286 = vsyncadd %s2276, %s2285
          %s2287 = smul.addr %s2283, 8
          %s2288 = smul.addr %s25, 256
          %s2289 = sadd.s32 %s2287, %s2288
          %s2290 = smul.addr %s2289, 128
          %s2291 = scalar_lea.hbm %s3, %s2290
          %s2292 = sshll.u32 %s2279, 4
          %s2293 = int_to_ptr.vmem [resolvable:$true] %s2292
          %2298 = dma.vmem_to_hbm [thread:$0]  %s2293, 32768, %s2291, %s2276, 1024, 1024, 64
        $region48: #{tpu_custom_call.1} parent=31 // pred_fallthru
          _
      $region32: #{tpu_custom_call.1} parent=5 // pred_fallthru
        _
      %p2299 = scmp.le.s32.totalorder 2, %s16
      // Predicated region
      $region49: #{tpu_custom_call.1} parent=5 // pred_check
        %p2300 = pneg %p2299
      $region50: #{tpu_custom_call.1} parent=5 // pred_check_branch
        %2302 = sbr.rel (%p2300) target = $region52
      $region51: #{tpu_custom_call.1} parent=5 // pred_region
        %s2303 = ssub.s32 %s16, 2
        // Predicated region
        $region53: #{tpu_custom_call.1} parent=51 // pred_check
          %p2304 = pneg %p127
        $region54: #{tpu_custom_call.1} parent=51 // pred_check_branch
          %2306 = sbr.rel (%p2304) target = $region56
        $region55: #{tpu_custom_call.1} parent=51 // pred_region
          %s2307 = sand.u32 %s112, 1
          %s2308 = scalar_lea.sflag [#allocation4], %s2307
          %s2309 = sand.u32 %s112, 1
          %s2310 = smul.addr %s2309, 2048
          %s2311 = scalar_lea.vmem [#allocation8], %s2310
          %2312 = dma.done %s2308, 32768
        $region56: #{tpu_custom_call.1} parent=51 // pred_fallthru
          _
      $region52: #{tpu_custom_call.1} parent=5 // pred_fallthru
        _
    $region6: #{tpu_custom_call.1} parent=1 // loop_footer
      %s20 = sadd.s32 1, %s16
    $region7: #{tpu_custom_call.1} parent=1 // loop_footer_branch
      %15 = sbr.rel target = $region3
    $region8: #{tpu_custom_call.1} parent=1 // loop_exit
      _
    %2313 = vsyncpa [#allocation3], 1
    %s2314 = scalar_lea.sflag [#allocation3], 1
    %2315 = vsyncpa %s2314, 1
    %2316 = vsyncpa [#allocation6], 1
    %2317 = vsyncpa [#allocation4], 1
    %s2318 = scalar_lea.sflag [#allocation4], 1
    %2319 = vsyncpa %s2318, 1

</llo_original>
